<compile_context>
chip_gen: v6e
topology: v6e:2x2x1
jax: 0.10.0
libtpu: 0.0.40
codegen_flags: <defaults>
</compile_context>

<pallas_src>
import functools

import jax
import jax.numpy as jnp
from jax import lax
from jax.experimental import pallas as pl
from jax.experimental.pallas import tpu as pltpu

LANE = 128


def _ru(x, m):
    return (x + m - 1) // m * m


def _vmem_limit_bytes():
    """Per-generation scoped-VMEM limit (v5e/v6e: 128 MiB, v7x: 64 MiB per TC)."""
    cap = None
    try:
        cap = getattr(pltpu.get_tpu_info(), "vmem_capacity_bytes", None)
    except Exception:
        cap = None
    if not cap:
        cap = 64 * 1024 * 1024            # conservative: v7x per-TensorCore VMEM
    return int(min(cap * 3 // 4, 100 * 1024 * 1024))


# -----------------------------------------------------------------------------
# Pallas kernels
# -----------------------------------------------------------------------------
def _conv_tap_kernel(x_ref, w_ref, b_ref, scale_ref, shift_ref, out_ref, *,
                     taps, rows, cin):
    """One image of: out = (relu(conv(x) + b)) * scale + shift, stored bf16.

    x_ref   : (1, R, Cs)   bf16 space-to-depth'd, zero-padded image (rows=Hb*Wb)
    w_ref   : (k*k, Cin, Cout_pad) bf16 weights, tap-major (resident)
    b_ref, scale_ref, shift_ref : (1, Cout_pad) f32 conv bias / folded BN affine
    out_ref : (1, rows, Cout_pad) bf16, rows = oh*Wb + ow (cols ow>=Wo are junk,
              sliced off by the caller).
    Tap accumulation happens entirely in VMEM/vregs -> no HBM im2col blow-up.
    """
    # Upcast once: unaligned sublane slicing is cheapest on 32-bit layouts.
    x = x_ref[0].astype(jnp.float32)                       # (R, Cs)
    acc = jnp.zeros((rows, w_ref.shape[-1]), jnp.float32)
    for t, (row_off, ch_off) in enumerate(taps):
        tap = x[row_off:row_off + rows, ch_off:ch_off + cin]
        # Per-tap partial matmul, f32 accumulation.  (A single concatenated
        # (rows, k*k*cin) patch matrix would use the MXU better when
        # compute-bound; these layers are bandwidth-bound, so keep it simple.)
        acc += jnp.dot(tap.astype(jnp.bfloat16), w_ref[t],
                       preferred_element_type=jnp.float32)
    y = jnp.maximum(acc + b_ref[...], 0.0)                 # conv bias + ReLU
    y = y * scale_ref[...] + shift_ref[...]                # BatchNorm (eval, folded)
    # Dropout2d is identity in eval mode.
    out_ref[0] = y.astype(out_ref.dtype)                   # bf16 writeback


def _fc_kernel(x_ref, w_ref, b_ref, out_ref, acc_ref):
    """Fused fc_mu|fc_var head: out = x @ W_cat + b_cat, K-gridded, f32 acc."""
    @pl.when(pl.program_id(0) == 0)
    def _():
        acc_ref[...] = jnp.zeros_like(acc_ref)

    acc_ref[...] += jnp.dot(x_ref[...], w_ref[...],
                            preferred_element_type=jnp.float32)

    @pl.when(pl.program_id(0) == pl.num_programs(0) - 1)
    def _():
        out_ref[...] = acc_ref[...] + b_ref[...]


# -----------------------------------------------------------------------------
# Pallas wrappers
# -----------------------------------------------------------------------------
def conv_layer(x_nhwc, p, cout_real, *, k, s, vmem_limit):
    """Conv(k, s, pad=(k-1)//2) + bias + ReLU + folded BN, fused in one kernel.

    x_nhwc: (N, H, W, Cin) (real channels).  Returns (N, Ho, Wo, cout_real) bf16.
    """
    N, H, W, C = x_nhwc.shape
    pad = (k - 1) // 2
    Ho = (H + 2 * pad - k) // s + 1
    Wo = (W + 2 * pad - k) // s + 1
    d_max = (k - 1) // s                  # max tap offset in block (s2d) coords
    Hb = Ho + d_max + 1                   # +1 block row: slack for flat-shift reads
    Wb = Wo + d_max
    Hp, Wp = Hb * s, Wb * s               # padded extent in pixels

    xpad = jnp.pad(
        x_nhwc.astype(jnp.bfloat16),
        ((0, 0), (pad, max(0, Hp - H - pad)), (pad, max(0, Wp - W - pad)), (0, 0)))
    xpad = xpad[:, :Hp, :Wp, :]
    if s > 1:
        # space-to-depth: stride folded into channels -> taps become unit-stride.
        xs = xpad.reshape(N, Hb, s, Wb, s, C).transpose(0, 1, 3, 2, 4, 5)
        xs = xs.reshape(N, Hb, Wb, s * s * C)
    else:
        xs = xpad
    Cs = xs.shape[-1]
    xs = xs.reshape(N, Hb * Wb, Cs)       # contiguous -> free reshape
    R = Hb * Wb
    rows = Ho * Wb                        # per-image GEMM rows (Wb-Wo junk cols)

    # Static tap table: (flat row offset in s2d coords, channel-slab offset).
    taps = []
    for di in range(k):
        for dj in range(k):
            taps.append(((di // s) * Wb + (dj // s),
                         ((di % s) * s + (dj % s)) * C))

    kk, cin, cout_pad = p["w"].shape
    assert kk == k * k and cin == C

    kern = functools.partial(_conv_tap_kernel, taps=tuple(taps), rows=rows, cin=C)
    # TODO(synk): add an output-row tiling grid axis (with halo) for images too
    # large for a single per-image VMEM block; not needed at these sizes.
    out = pl.pallas_call(
        kern,
        out_shape=jax.ShapeDtypeStruct((N, rows, cout_pad), jnp.bfloat16),
        grid_spec=pltpu.PrefetchScalarGridSpec(
            num_scalar_prefetch=0,
            grid=(N,),
            in_specs=[
                pl.BlockSpec((1, R, Cs), lambda n: (n, 0, 0)),        # activation
                pl.BlockSpec((kk, cin, cout_pad), lambda n: (0, 0, 0)),  # weights
                pl.BlockSpec((1, cout_pad), lambda n: (0, 0)),        # conv bias
                pl.BlockSpec((1, cout_pad), lambda n: (0, 0)),        # BN scale
                pl.BlockSpec((1, cout_pad), lambda n: (0, 0)),        # BN shift
            ],
            out_specs=pl.BlockSpec((1, rows, cout_pad), lambda n: (n, 0, 0)),
        ),
        compiler_params=pltpu.CompilerParams(
            dimension_semantics=("parallel",),     # batch shards across TCs (v7x)
            vmem_limit_bytes=vmem_limit),
        cost_estimate=pl.CostEstimate(
            flops=2 * N * rows * kk * cin * cout_pad,
            transcendentals=0,
            bytes_accessed=(N * R * Cs * 2 + kk * cin * cout_pad * 2
                            + 3 * cout_pad * 4 + N * rows * cout_pad * 2)),
    )(xs, p["w"], p["b"], p["scale"], p["shift"])

    out = out.reshape(N, Ho, Wb, cout_pad)
    # Drop flat-shift junk columns and the lane padding of the channel axis so
    # the next layer / FC only sees (and pays HBM bytes for) real channels.
    return out[:, :, :Wo, :cout_real]


def fc_heads(x, w, b, *, vmem_limit):
    """Fused fc_mu|fc_var: (Np, F) @ (F, L2_pad) + b, K axis optionally gridded."""
    Np, F = x.shape
    l2p = w.shape[1]
    budget = vmem_limit // 3

    def fits(t):
        return 2 * (Np * t * 2 + t * l2p * 2) + 2 * Np * l2p * 4 <= budget

    if fits(F):
        tile_f = F
    else:
        tile_f = None
        for t in (4096, 2048, 1024, 512, 256, 128):
            if F % t == 0 and fits(t):
                tile_f = t
                break
        if tile_f is None:
            tile_f = 128 if F % 128 == 0 else F

    # TODO(synk): for large Np/latent on v7x, add a parallel grid axis over the
    # output rows/lanes so both TensorCores participate (irrelevant at Np=2).
    return pl.pallas_call(
        _fc_kernel,
        out_shape=jax.ShapeDtypeStruct((Np, l2p), jnp.float32),
        grid_spec=pltpu.PrefetchScalarGridSpec(
            num_scalar_prefetch=0,
            grid=(F // tile_f,),
            in_specs=[
                pl.BlockSpec((Np, tile_f), lambda kk: (0, kk)),
                pl.BlockSpec((tile_f, l2p), lambda kk: (kk, 0)),
                pl.BlockSpec((1, l2p), lambda kk: (0, 0)),
            ],
            out_specs=pl.BlockSpec((Np, l2p), lambda kk: (0, 0)),
            scratch_shapes=[pltpu.VMEM((Np, l2p), jnp.float32)],
        ),
        compiler_params=pltpu.CompilerParams(
            dimension_semantics=("arbitrary",),    # K (reduction) axis
            vmem_limit_bytes=vmem_limit),
        cost_estimate=pl.CostEstimate(
            flops=2 * Np * F * l2p,
            transcendentals=0,
            bytes_accessed=Np * F * 2 + F * l2p * 2 + Np * l2p * 4),
    )(x, w, b)


# -----------------------------------------------------------------------------
# Encoder forward
# -----------------------------------------------------------------------------
def encoder_forward(x_nchw, params, *, conv_filters, conv_kernels, conv_strides,
                    latent_dim, vmem_limit):
    """x_nchw: (N, C, H, W) f32 -> (mu, log_var), matching the torch module."""
    x = jnp.transpose(x_nchw, (0, 2, 3, 1))           # NCHW -> NHWC
    for li, (f, k, s) in enumerate(zip(conv_filters, conv_kernels, conv_strides)):
        x = conv_layer(x, params["conv"][li], f, k=k, s=s, vmem_limit=vmem_limit)
    # Flatten: fc weight rows were permuted at build time so the NHWC flatten of
    # the REAL-channel activation matches PyTorch's NCHW flatten.  nn.Dropout is
    # identity in eval mode.
    N = x.shape[0]
    flat = x.reshape(N, -1)                           # bf16, true flatten size
    out = fc_heads(flat, params["fc_w"], params["fc_b"], vmem_limit=vmem_limit)
    mu = out[:, :latent_dim]
    log_var = out[:, latent_dim:2 * latent_dim]
    return mu, log_var


# -----------------------------------------------------------------------------
# Deterministic parameter construction (folding / padding done once here)
# -----------------------------------------------------------------------------
def build_params(key, input_shape, conv_filters, conv_kernels, conv_strides,
                 latent_dim):
    H, W, C = input_shape
    params = {"conv": []}
    ref = {"conv": []}
    in_ch = C
    h, w_sz = H, W
    for f, k, s in zip(conv_filters, conv_kernels, conv_strides):
        key, k1, k2 = jax.random.split(key, 3)
        cout_pad = _ru(f, LANE)
        w_torch = 0.1 * jax.random.normal(k1, (f, in_ch, k, k), jnp.float32)
        b = 0.05 * jax.random.normal(k2, (f,), jnp.float32)
        gamma = 1.0 + 0.01 * jnp.arange(f, dtype=jnp.float32)
        beta = 0.02 * jnp.arange(f, dtype=jnp.float32)
        mean = 0.01 * jnp.arange(f, dtype=jnp.float32)
        var = 1.0 + 0.1 * jnp.arange(f, dtype=jnp.float32)
        scale = gamma * lax.rsqrt(var + 1e-5)          # BN(eval) folded
        shift = beta - mean * scale
        # (Cout, Cin, kh, kw) -> (k*k, Cin, Cout_pad), tap-major rows, K unpadded.
        w2 = jnp.zeros((k, k, in_ch, cout_pad), jnp.float32)
        w2 = w2.at[:, :, :, :f].set(jnp.transpose(w_torch, (2, 3, 1, 0)))
        w2 = w2.reshape(k * k, in_ch, cout_pad)

        def _pad_vec(v):
            return jnp.pad(v, (0, cout_pad - f)).reshape(1, cout_pad)

        params["conv"].append(dict(
            w=w2.astype(jnp.bfloat16),
            b=_pad_vec(b), scale=_pad_vec(scale), shift=_pad_vec(shift)))
        ref["conv"].append(dict(w=w_torch, b=b, gamma=gamma, beta=beta,
                                mean=mean, var=var))
        p = (k - 1) // 2
        h = (h + 2 * p - k) // s + 1
        w_sz = (w_sz + 2 * p - k) // s + 1
        in_ch = f

    # Fused, permuted, lane-padded FC heads (mu | log_var concatenated).
    flat_size = in_ch * h * w_sz                       # real flatten size
    key, k1, k2, k3, k4 = jax.random.split(key, 5)
    wmu = 0.05 * jax.random.normal(k1, (flat_size, latent_dim), jnp.float32)
    wvar = 0.05 * jax.random.normal(k2, (flat_size, latent_dim), jnp.float32)
    bmu = 0.01 * jax.random.normal(k3, (latent_dim,), jnp.float32)
    bvar = 0.01 * jax.random.normal(k4, (latent_dim,), jnp.float32)
    wcat = jnp.concatenate([wmu, wvar], axis=1)        # (flat_size, 2*latent)
    l2_pad = _ru(2 * latent_dim, LANE)
    fc_w = jnp.zeros((flat_size, l2_pad), jnp.float32)
    hh, ww, cc = jnp.meshgrid(jnp.arange(h), jnp.arange(w_sz),
                              jnp.arange(in_ch), indexing="ij")
    dst = ((hh * w_sz + ww) * in_ch + cc).reshape(-1)  # NHWC (real-C) flatten row
    src = (cc * (h * w_sz) + hh * w_sz + ww).reshape(-1)  # PyTorch NCHW flatten row
    fc_w = fc_w.at[dst, :2 * latent_dim].set(wcat[src])
    fc_b = jnp.zeros((1, l2_pad), jnp.float32)
    fc_b = fc_b.at[0, :latent_dim].set(bmu)
    fc_b = fc_b.at[0, latent_dim:2 * latent_dim].set(bvar)
    params["fc_w"] = fc_w.astype(jnp.bfloat16)
    params["fc_b"] = fc_b
    ref["fc"] = dict(wmu=wmu, wvar=wvar, bmu=bmu, bvar=bvar)
    return params, ref


# -----------------------------------------------------------------------------
# Pure-JAX f32 reference (same math as the torch module, eval mode)
# -----------------------------------------------------------------------------
def reference_forward(x_nchw, ref, conv_kernels, conv_strides):
    x = x_nchw
    for rp, k, s in zip(ref["conv"], conv_kernels, conv_strides):
        p = (k - 1) // 2
        x = lax.conv_general_dilated(
            x, rp["w"], window_strides=(s, s), padding=[(p, p), (p, p)],
            dimension_numbers=("NCHW", "OIHW", "NCHW"))
        x = x + rp["b"][None, :, None, None]
        x = jnp.maximum(x, 0.0)
        sc = rp["gamma"] * lax.rsqrt(rp["var"] + 1e-5)
        x = ((x - rp["mean"][None, :, None, None]) * sc[None, :, None, None]
             + rp["beta"][None, :, None, None])
    flat = x.reshape(x.shape[0], -1)
    mu = flat @ ref["fc"]["wmu"] + ref["fc"]["bmu"]
    log_var = flat @ ref["fc"]["wvar"] + ref["fc"]["bvar"]
    return mu, log_var


if __name__ == "__main__":
    # small config: input (H=16, W=16, C=4), 2 conv layers, latent_dim=8
    input_shape = (16, 16, 4)
    conv_filters = [8, 16]
    conv_kernels = [3, 3]
    conv_strides = [2, 2]
    latent_dim = 8
    batch = 2

    key = jax.random.PRNGKey(0)
    key, kx = jax.random.split(key)
    x = jax.random.normal(
        kx, (batch, input_shape[2], input_shape[0], input_shape[1]),
        jnp.float32)                                   # NCHW like torch

    params, ref_params = build_params(key, input_shape, conv_filters,
                                      conv_kernels, conv_strides, latent_dim)

    # TODO(synk): training-mode Dropout/Dropout2d (stochastic masks) are not
    # implemented; eval-mode identity is used, matching the inference forward.
    fwd = jax.jit(functools.partial(encoder_forward,
                                    conv_filters=tuple(conv_filters),
                                    conv_kernels=tuple(conv_kernels),
                                    conv_strides=tuple(conv_strides),
                                    latent_dim=latent_dim,
                                    vmem_limit=_vmem_limit_bytes()))
    mu, log_var = fwd(x, params)
    jax.block_until_ready((mu, log_var))

    assert mu.shape == (batch, latent_dim)
    assert log_var.shape == (batch, latent_dim)
    assert bool(jnp.all(jnp.isfinite(mu))) and bool(jnp.all(jnp.isfinite(log_var)))

    # Loose tolerance: bf16 MXU operands vs. the f32 reference.
    mu_ref, lv_ref = reference_forward(x, ref_params, conv_kernels, conv_strides)
    err = max(float(jnp.max(jnp.abs(mu - mu_ref))),
              float(jnp.max(jnp.abs(log_var - lv_ref))))
    assert err < 0.2, f"mismatch vs reference: max abs err = {err}"
    print("KERNEL_OK")
</pallas_src>

<mosaic_0001>
module attributes {stable_mosaic.version = 11 : i64} {
  func.func @_conv_tap_kernel(%arg0: i32, %arg1: memref<1x90x16xbf16, #tpu.memory_space<vmem>>, %arg2: memref<9x4x128xbf16, #tpu.memory_space<vmem>>, %arg3: memref<1x128xf32, #tpu.memory_space<vmem>>, %arg4: memref<1x128xf32, #tpu.memory_space<vmem>>, %arg5: memref<1x128xf32, #tpu.memory_space<vmem>>, %arg6: memref<1x72x128xbf16, #tpu.memory_space<vmem>>) attributes {dimension_semantics = [#tpu.dimension_semantics<parallel>], iteration_bounds = array<i64: 2>, scalar_prefetch = 0 : i64, scratch_operands = 0 : i64, tpu.core_type = #tpu.core_type<tc>, window_params = [{transform_indices = @transform_0, window_bounds = array<i64: 1, 90, 16>}, {pipeline_mode = #tpu.pipeline_mode<synchronous>, transform_indices = @transform_1, window_bounds = array<i64: 9, 4, 128>}, {pipeline_mode = #tpu.pipeline_mode<synchronous>, transform_indices = @transform_2, window_bounds = array<i64: 1, 128>}, {pipeline_mode = #tpu.pipeline_mode<synchronous>, transform_indices = @transform_3, window_bounds = array<i64: 1, 128>}, {pipeline_mode = #tpu.pipeline_mode<synchronous>, transform_indices = @transform_4, window_bounds = array<i64: 1, 128>}, {transform_indices = @transform_5, window_bounds = array<i64: 1, 72, 128>}]} {
    %c0 = arith.constant 0 : index
    %c0_0 = arith.constant 0 : index
    %c0_1 = arith.constant 0 : index
    %0 = vector.load %arg1[%c0, %c0_0, %c0_1] : memref<1x90x16xbf16, #tpu.memory_space<vmem>>, vector<1x90x16xbf16>
    %1 = vector.shape_cast %0 : vector<1x90x16xbf16> to vector<90x16xbf16>
    %2 = arith.extf %1 : vector<90x16xbf16> to vector<90x16xf32>
    %cst = arith.constant 0.000000e+00 : f32
    %3 = vector.broadcast %cst : f32 to vector<72x128xf32>
    %4 = vector.extract_strided_slice %2 {offsets = [0, 0], sizes = [72, 4], strides = [1, 1]} : vector<90x16xf32> to vector<72x4xf32>
    %5 = arith.truncf %4 : vector<72x4xf32> to vector<72x4xbf16>
    %c0_2 = arith.constant 0 : index
    %c0_3 = arith.constant 0 : index
    %c0_4 = arith.constant 0 : index
    %6 = vector.load %arg2[%c0_2, %c0_3, %c0_4] : memref<9x4x128xbf16, #tpu.memory_space<vmem>>, vector<1x4x128xbf16>
    %7 = vector.shape_cast %6 : vector<1x4x128xbf16> to vector<4x128xbf16>
    %cst_5 = arith.constant dense<0.000000e+00> : vector<72x128xf32>
    %8 = tpu.matmul %5, %7, %cst_5 {dimension_numbers = #tpu.dot_dimension_numbers<[1], [0], [0], [1], [0, 0, 1, 1], [], []>} : vector<72x4xbf16>, vector<4x128xbf16>, vector<72x128xf32> -> vector<72x128xf32>
    %9 = arith.addf %3, %8 : vector<72x128xf32>
    %10 = vector.extract_strided_slice %2 {offsets = [0, 4], sizes = [72, 4], strides = [1, 1]} : vector<90x16xf32> to vector<72x4xf32>
    %11 = arith.truncf %10 : vector<72x4xf32> to vector<72x4xbf16>
    %c1 = arith.constant 1 : index
    %c0_6 = arith.constant 0 : index
    %c0_7 = arith.constant 0 : index
    %12 = vector.load %arg2[%c1, %c0_6, %c0_7] : memref<9x4x128xbf16, #tpu.memory_space<vmem>>, vector<1x4x128xbf16>
    %13 = vector.shape_cast %12 : vector<1x4x128xbf16> to vector<4x128xbf16>
    %cst_8 = arith.constant dense<0.000000e+00> : vector<72x128xf32>
    %14 = tpu.matmul %11, %13, %cst_8 {dimension_numbers = #tpu.dot_dimension_numbers<[1], [0], [0], [1], [0, 0, 1, 1], [], []>} : vector<72x4xbf16>, vector<4x128xbf16>, vector<72x128xf32> -> vector<72x128xf32>
    %15 = arith.addf %9, %14 : vector<72x128xf32>
    %16 = vector.extract_strided_slice %2 {offsets = [1, 0], sizes = [72, 4], strides = [1, 1]} : vector<90x16xf32> to vector<72x4xf32>
    %17 = arith.truncf %16 : vector<72x4xf32> to vector<72x4xbf16>
    %c2 = arith.constant 2 : index
    %c0_9 = arith.constant 0 : index
    %c0_10 = arith.constant 0 : index
    %18 = vector.load %arg2[%c2, %c0_9, %c0_10] : memref<9x4x128xbf16, #tpu.memory_space<vmem>>, vector<1x4x128xbf16>
    %19 = vector.shape_cast %18 : vector<1x4x128xbf16> to vector<4x128xbf16>
    %cst_11 = arith.constant dense<0.000000e+00> : vector<72x128xf32>
    %20 = tpu.matmul %17, %19, %cst_11 {dimension_numbers = #tpu.dot_dimension_numbers<[1], [0], [0], [1], [0, 0, 1, 1], [], []>} : vector<72x4xbf16>, vector<4x128xbf16>, vector<72x128xf32> -> vector<72x128xf32>
    %21 = arith.addf %15, %20 : vector<72x128xf32>
    %22 = vector.extract_strided_slice %2 {offsets = [0, 8], sizes = [72, 4], strides = [1, 1]} : vector<90x16xf32> to vector<72x4xf32>
    %23 = arith.truncf %22 : vector<72x4xf32> to vector<72x4xbf16>
    %c3 = arith.constant 3 : index
    %c0_12 = arith.constant 0 : index
    %c0_13 = arith.constant 0 : index
    %24 = vector.load %arg2[%c3, %c0_12, %c0_13] : memref<9x4x128xbf16, #tpu.memory_space<vmem>>, vector<1x4x128xbf16>
    %25 = vector.shape_cast %24 : vector<1x4x128xbf16> to vector<4x128xbf16>
    %cst_14 = arith.constant dense<0.000000e+00> : vector<72x128xf32>
    %26 = tpu.matmul %23, %25, %cst_14 {dimension_numbers = #tpu.dot_dimension_numbers<[1], [0], [0], [1], [0, 0, 1, 1], [], []>} : vector<72x4xbf16>, vector<4x128xbf16>, vector<72x128xf32> -> vector<72x128xf32>
    %27 = arith.addf %21, %26 : vector<72x128xf32>
    %28 = vector.extract_strided_slice %2 {offsets = [0, 12], sizes = [72, 4], strides = [1, 1]} : vector<90x16xf32> to vector<72x4xf32>
    %29 = arith.truncf %28 : vector<72x4xf32> to vector<72x4xbf16>
    %c4 = arith.constant 4 : index
    %c0_15 = arith.constant 0 : index
    %c0_16 = arith.constant 0 : index
    %30 = vector.load %arg2[%c4, %c0_15, %c0_16] : memref<9x4x128xbf16, #tpu.memory_space<vmem>>, vector<1x4x128xbf16>
    %31 = vector.shape_cast %30 : vector<1x4x128xbf16> to vector<4x128xbf16>
    %cst_17 = arith.constant dense<0.000000e+00> : vector<72x128xf32>
    %32 = tpu.matmul %29, %31, %cst_17 {dimension_numbers = #tpu.dot_dimension_numbers<[1], [0], [0], [1], [0, 0, 1, 1], [], []>} : vector<72x4xbf16>, vector<4x128xbf16>, vector<72x128xf32> -> vector<72x128xf32>
    %33 = arith.addf %27, %32 : vector<72x128xf32>
    %34 = vector.extract_strided_slice %2 {offsets = [1, 8], sizes = [72, 4], strides = [1, 1]} : vector<90x16xf32> to vector<72x4xf32>
    %35 = arith.truncf %34 : vector<72x4xf32> to vector<72x4xbf16>
    %c5 = arith.constant 5 : index
    %c0_18 = arith.constant 0 : index
    %c0_19 = arith.constant 0 : index
    %36 = vector.load %arg2[%c5, %c0_18, %c0_19] : memref<9x4x128xbf16, #tpu.memory_space<vmem>>, vector<1x4x128xbf16>
    %37 = vector.shape_cast %36 : vector<1x4x128xbf16> to vector<4x128xbf16>
    %cst_20 = arith.constant dense<0.000000e+00> : vector<72x128xf32>
    %38 = tpu.matmul %35, %37, %cst_20 {dimension_numbers = #tpu.dot_dimension_numbers<[1], [0], [0], [1], [0, 0, 1, 1], [], []>} : vector<72x4xbf16>, vector<4x128xbf16>, vector<72x128xf32> -> vector<72x128xf32>
    %39 = arith.addf %33, %38 : vector<72x128xf32>
    %40 = vector.extract_strided_slice %2 {offsets = [9, 0], sizes = [72, 4], strides = [1, 1]} : vector<90x16xf32> to vector<72x4xf32>
    %41 = arith.truncf %40 : vector<72x4xf32> to vector<72x4xbf16>
    %c6 = arith.constant 6 : index
    %c0_21 = arith.constant 0 : index
    %c0_22 = arith.constant 0 : index
    %42 = vector.load %arg2[%c6, %c0_21, %c0_22] : memref<9x4x128xbf16, #tpu.memory_space<vmem>>, vector<1x4x128xbf16>
    %43 = vector.shape_cast %42 : vector<1x4x128xbf16> to vector<4x128xbf16>
    %cst_23 = arith.constant dense<0.000000e+00> : vector<72x128xf32>
    %44 = tpu.matmul %41, %43, %cst_23 {dimension_numbers = #tpu.dot_dimension_numbers<[1], [0], [0], [1], [0, 0, 1, 1], [], []>} : vector<72x4xbf16>, vector<4x128xbf16>, vector<72x128xf32> -> vector<72x128xf32>
    %45 = arith.addf %39, %44 : vector<72x128xf32>
    %46 = vector.extract_strided_slice %2 {offsets = [9, 4], sizes = [72, 4], strides = [1, 1]} : vector<90x16xf32> to vector<72x4xf32>
    %47 = arith.truncf %46 : vector<72x4xf32> to vector<72x4xbf16>
    %c7 = arith.constant 7 : index
    %c0_24 = arith.constant 0 : index
    %c0_25 = arith.constant 0 : index
    %48 = vector.load %arg2[%c7, %c0_24, %c0_25] : memref<9x4x128xbf16, #tpu.memory_space<vmem>>, vector<1x4x128xbf16>
    %49 = vector.shape_cast %48 : vector<1x4x128xbf16> to vector<4x128xbf16>
    %cst_26 = arith.constant dense<0.000000e+00> : vector<72x128xf32>
    %50 = tpu.matmul %47, %49, %cst_26 {dimension_numbers = #tpu.dot_dimension_numbers<[1], [0], [0], [1], [0, 0, 1, 1], [], []>} : vector<72x4xbf16>, vector<4x128xbf16>, vector<72x128xf32> -> vector<72x128xf32>
    %51 = arith.addf %45, %50 : vector<72x128xf32>
    %52 = vector.extract_strided_slice %2 {offsets = [10, 0], sizes = [72, 4], strides = [1, 1]} : vector<90x16xf32> to vector<72x4xf32>
    %53 = arith.truncf %52 : vector<72x4xf32> to vector<72x4xbf16>
    %c8 = arith.constant 8 : index
    %c0_27 = arith.constant 0 : index
    %c0_28 = arith.constant 0 : index
    %54 = vector.load %arg2[%c8, %c0_27, %c0_28] : memref<9x4x128xbf16, #tpu.memory_space<vmem>>, vector<1x4x128xbf16>
    %55 = vector.shape_cast %54 : vector<1x4x128xbf16> to vector<4x128xbf16>
    %cst_29 = arith.constant dense<0.000000e+00> : vector<72x128xf32>
    %56 = tpu.matmul %53, %55, %cst_29 {dimension_numbers = #tpu.dot_dimension_numbers<[1], [0], [0], [1], [0, 0, 1, 1], [], []>} : vector<72x4xbf16>, vector<4x128xbf16>, vector<72x128xf32> -> vector<72x128xf32>
    %57 = arith.addf %51, %56 : vector<72x128xf32>
    %c0_30 = arith.constant 0 : index
    %c0_31 = arith.constant 0 : index
    %58 = vector.load %arg3[%c0_30, %c0_31] : memref<1x128xf32, #tpu.memory_space<vmem>>, vector<1x128xf32>
    %59 = vector.broadcast %58 : vector<1x128xf32> to vector<72x128xf32>
    %60 = arith.addf %57, %59 : vector<72x128xf32>
    %cst_32 = arith.constant 0.000000e+00 : f32
    %61 = vector.broadcast %cst_32 : f32 to vector<72x128xf32>
    %62 = arith.maximumf %60, %61 : vector<72x128xf32>
    %c0_33 = arith.constant 0 : index
    %c0_34 = arith.constant 0 : index
    %63 = vector.load %arg4[%c0_33, %c0_34] : memref<1x128xf32, #tpu.memory_space<vmem>>, vector<1x128xf32>
    %64 = vector.broadcast %63 : vector<1x128xf32> to vector<72x128xf32>
    %65 = arith.mulf %62, %64 : vector<72x128xf32>
    %c0_35 = arith.constant 0 : index
    %c0_36 = arith.constant 0 : index
    %66 = vector.load %arg5[%c0_35, %c0_36] : memref<1x128xf32, #tpu.memory_space<vmem>>, vector<1x128xf32>
    %67 = vector.broadcast %66 : vector<1x128xf32> to vector<72x128xf32>
    %68 = arith.addf %65, %67 : vector<72x128xf32>
    %69 = arith.truncf %68 : vector<72x128xf32> to vector<72x128xbf16>
    %c0_37 = arith.constant 0 : index
    %c0_38 = arith.constant 0 : index
    %c0_39 = arith.constant 0 : index
    %70 = vector.load %arg6[%c0_37, %c0_38, %c0_39] : memref<1x72x128xbf16, #tpu.memory_space<vmem>>, vector<1x72x128xbf16>
    %71 = vector.shape_cast %70 : vector<1x72x128xbf16> to vector<72x128xbf16>
    %72 = vector.shape_cast %69 : vector<72x128xbf16> to vector<1x72x128xbf16>
    tpu.vector_store %arg6[%c0_37, %c0_38, %c0_39], %72 {strides = array<i32>} : memref<1x72x128xbf16, #tpu.memory_space<vmem>>, vector<1x72x128xbf16>,
    return
  }
  func.func @transform_0(%arg0: i32) -> (i32, i32, i32) {
    %c0_i32 = arith.constant 0 : i32
    %c0_i32_0 = arith.constant 0 : i32
    %c0_i32_1 = arith.constant 0 : i32
    return %arg0, %c0_i32, %c0_i32_0 : i32, i32, i32
  }
  func.func @transform_1(%arg0: i32) -> (i32, i32, i32) {
    %c0_i32 = arith.constant 0 : i32
    %c0_i32_0 = arith.constant 0 : i32
    %c0_i32_1 = arith.constant 0 : i32
    %c0_i32_2 = arith.constant 0 : i32
    return %c0_i32, %c0_i32_0, %c0_i32_1 : i32, i32, i32
  }
  func.func @transform_2(%arg0: i32) -> (i32, i32) {
    %c0_i32 = arith.constant 0 : i32
    %c0_i32_0 = arith.constant 0 : i32
    %c0_i32_1 = arith.constant 0 : i32
    return %c0_i32, %c0_i32_0 : i32, i32
  }
  func.func @transform_3(%arg0: i32) -> (i32, i32) {
    %c0_i32 = arith.constant 0 : i32
    %c0_i32_0 = arith.constant 0 : i32
    %c0_i32_1 = arith.constant 0 : i32
    return %c0_i32, %c0_i32_0 : i32, i32
  }
  func.func @transform_4(%arg0: i32) -> (i32, i32) {
    %c0_i32 = arith.constant 0 : i32
    %c0_i32_0 = arith.constant 0 : i32
    %c0_i32_1 = arith.constant 0 : i32
    return %c0_i32, %c0_i32_0 : i32, i32
  }
  func.func @transform_5(%arg0: i32) -> (i32, i32, i32) {
    %c0_i32 = arith.constant 0 : i32
    %c0_i32_0 = arith.constant 0 : i32
    %c0_i32_1 = arith.constant 0 : i32
    return %arg0, %c0_i32, %c0_i32_0 : i32, i32, i32
  }
}

module attributes {stable_mosaic.version = 11 : i64} {
  func.func @_conv_tap_kernel(%arg0: i32, %arg1: memref<1x30x32xbf16, #tpu.memory_space<vmem>>, %arg2: memref<9x8x128xbf16, #tpu.memory_space<vmem>>, %arg3: memref<1x128xf32, #tpu.memory_space<vmem>>, %arg4: memref<1x128xf32, #tpu.memory_space<vmem>>, %arg5: memref<1x128xf32, #tpu.memory_space<vmem>>, %arg6: memref<1x20x128xbf16, #tpu.memory_space<vmem>>) attributes {dimension_semantics = [#tpu.dimension_semantics<parallel>], iteration_bounds = array<i64: 2>, scalar_prefetch = 0 : i64, scratch_operands = 0 : i64, tpu.core_type = #tpu.core_type<tc>, window_params = [{transform_indices = @transform_0, window_bounds = array<i64: 1, 30, 32>}, {pipeline_mode = #tpu.pipeline_mode<synchronous>, transform_indices = @transform_1, window_bounds = array<i64: 9, 8, 128>}, {pipeline_mode = #tpu.pipeline_mode<synchronous>, transform_indices = @transform_2, window_bounds = array<i64: 1, 128>}, {pipeline_mode = #tpu.pipeline_mode<synchronous>, transform_indices = @transform_3, window_bounds = array<i64: 1, 128>}, {pipeline_mode = #tpu.pipeline_mode<synchronous>, transform_indices = @transform_4, window_bounds = array<i64: 1, 128>}, {transform_indices = @transform_5, window_bounds = array<i64: 1, 20, 128>}]} {
    %c0 = arith.constant 0 : index
    %c0_0 = arith.constant 0 : index
    %c0_1 = arith.constant 0 : index
    %0 = vector.load %arg1[%c0, %c0_0, %c0_1] : memref<1x30x32xbf16, #tpu.memory_space<vmem>>, vector<1x30x32xbf16>
    %1 = vector.shape_cast %0 : vector<1x30x32xbf16> to vector<30x32xbf16>
    %2 = arith.extf %1 : vector<30x32xbf16> to vector<30x32xf32>
    %cst = arith.constant 0.000000e+00 : f32
    %3 = vector.broadcast %cst : f32 to vector<20x128xf32>
    %4 = vector.extract_strided_slice %2 {offsets = [0, 0], sizes = [20, 8], strides = [1, 1]} : vector<30x32xf32> to vector<20x8xf32>
    %5 = arith.truncf %4 : vector<20x8xf32> to vector<20x8xbf16>
    %c0_2 = arith.constant 0 : index
    %c0_3 = arith.constant 0 : index
    %c0_4 = arith.constant 0 : index
    %6 = vector.load %arg2[%c0_2, %c0_3, %c0_4] : memref<9x8x128xbf16, #tpu.memory_space<vmem>>, vector<1x8x128xbf16>
    %7 = vector.shape_cast %6 : vector<1x8x128xbf16> to vector<8x128xbf16>
    %cst_5 = arith.constant dense<0.000000e+00> : vector<20x128xf32>
    %8 = tpu.matmul %5, %7, %cst_5 {dimension_numbers = #tpu.dot_dimension_numbers<[1], [0], [0], [1], [0, 0, 1, 1], [], []>} : vector<20x8xbf16>, vector<8x128xbf16>, vector<20x128xf32> -> vector<20x128xf32>
    %9 = arith.addf %3, %8 : vector<20x128xf32>
    %10 = vector.extract_strided_slice %2 {offsets = [0, 8], sizes = [20, 8], strides = [1, 1]} : vector<30x32xf32> to vector<20x8xf32>
    %11 = arith.truncf %10 : vector<20x8xf32> to vector<20x8xbf16>
    %c1 = arith.constant 1 : index
    %c0_6 = arith.constant 0 : index
    %c0_7 = arith.constant 0 : index
    %12 = vector.load %arg2[%c1, %c0_6, %c0_7] : memref<9x8x128xbf16, #tpu.memory_space<vmem>>, vector<1x8x128xbf16>
    %13 = vector.shape_cast %12 : vector<1x8x128xbf16> to vector<8x128xbf16>
    %cst_8 = arith.constant dense<0.000000e+00> : vector<20x128xf32>
    %14 = tpu.matmul %11, %13, %cst_8 {dimension_numbers = #tpu.dot_dimension_numbers<[1], [0], [0], [1], [0, 0, 1, 1], [], []>} : vector<20x8xbf16>, vector<8x128xbf16>, vector<20x128xf32> -> vector<20x128xf32>
    %15 = arith.addf %9, %14 : vector<20x128xf32>
    %16 = vector.extract_strided_slice %2 {offsets = [1, 0], sizes = [20, 8], strides = [1, 1]} : vector<30x32xf32> to vector<20x8xf32>
    %17 = arith.truncf %16 : vector<20x8xf32> to vector<20x8xbf16>
    %c2 = arith.constant 2 : index
    %c0_9 = arith.constant 0 : index
    %c0_10 = arith.constant 0 : index
    %18 = vector.load %arg2[%c2, %c0_9, %c0_10] : memref<9x8x128xbf16, #tpu.memory_space<vmem>>, vector<1x8x128xbf16>
    %19 = vector.shape_cast %18 : vector<1x8x128xbf16> to vector<8x128xbf16>
    %cst_11 = arith.constant dense<0.000000e+00> : vector<20x128xf32>
    %20 = tpu.matmul %17, %19, %cst_11 {dimension_numbers = #tpu.dot_dimension_numbers<[1], [0], [0], [1], [0, 0, 1, 1], [], []>} : vector<20x8xbf16>, vector<8x128xbf16>, vector<20x128xf32> -> vector<20x128xf32>
    %21 = arith.addf %15, %20 : vector<20x128xf32>
    %22 = vector.extract_strided_slice %2 {offsets = [0, 16], sizes = [20, 8], strides = [1, 1]} : vector<30x32xf32> to vector<20x8xf32>
    %23 = arith.truncf %22 : vector<20x8xf32> to vector<20x8xbf16>
    %c3 = arith.constant 3 : index
    %c0_12 = arith.constant 0 : index
    %c0_13 = arith.constant 0 : index
    %24 = vector.load %arg2[%c3, %c0_12, %c0_13] : memref<9x8x128xbf16, #tpu.memory_space<vmem>>, vector<1x8x128xbf16>
    %25 = vector.shape_cast %24 : vector<1x8x128xbf16> to vector<8x128xbf16>
    %cst_14 = arith.constant dense<0.000000e+00> : vector<20x128xf32>
    %26 = tpu.matmul %23, %25, %cst_14 {dimension_numbers = #tpu.dot_dimension_numbers<[1], [0], [0], [1], [0, 0, 1, 1], [], []>} : vector<20x8xbf16>, vector<8x128xbf16>, vector<20x128xf32> -> vector<20x128xf32>
    %27 = arith.addf %21, %26 : vector<20x128xf32>
    %28 = vector.extract_strided_slice %2 {offsets = [0, 24], sizes = [20, 8], strides = [1, 1]} : vector<30x32xf32> to vector<20x8xf32>
    %29 = arith.truncf %28 : vector<20x8xf32> to vector<20x8xbf16>
    %c4 = arith.constant 4 : index
    %c0_15 = arith.constant 0 : index
    %c0_16 = arith.constant 0 : index
    %30 = vector.load %arg2[%c4, %c0_15, %c0_16] : memref<9x8x128xbf16, #tpu.memory_space<vmem>>, vector<1x8x128xbf16>
    %31 = vector.shape_cast %30 : vector<1x8x128xbf16> to vector<8x128xbf16>
    %cst_17 = arith.constant dense<0.000000e+00> : vector<20x128xf32>
    %32 = tpu.matmul %29, %31, %cst_17 {dimension_numbers = #tpu.dot_dimension_numbers<[1], [0], [0], [1], [0, 0, 1, 1], [], []>} : vector<20x8xbf16>, vector<8x128xbf16>, vector<20x128xf32> -> vector<20x128xf32>
    %33 = arith.addf %27, %32 : vector<20x128xf32>
    %34 = vector.extract_strided_slice %2 {offsets = [1, 16], sizes = [20, 8], strides = [1, 1]} : vector<30x32xf32> to vector<20x8xf32>
    %35 = arith.truncf %34 : vector<20x8xf32> to vector<20x8xbf16>
    %c5 = arith.constant 5 : index
    %c0_18 = arith.constant 0 : index
    %c0_19 = arith.constant 0 : index
    %36 = vector.load %arg2[%c5, %c0_18, %c0_19] : memref<9x8x128xbf16, #tpu.memory_space<vmem>>, vector<1x8x128xbf16>
    %37 = vector.shape_cast %36 : vector<1x8x128xbf16> to vector<8x128xbf16>
    %cst_20 = arith.constant dense<0.000000e+00> : vector<20x128xf32>
    %38 = tpu.matmul %35, %37, %cst_20 {dimension_numbers = #tpu.dot_dimension_numbers<[1], [0], [0], [1], [0, 0, 1, 1], [], []>} : vector<20x8xbf16>, vector<8x128xbf16>, vector<20x128xf32> -> vector<20x128xf32>
    %39 = arith.addf %33, %38 : vector<20x128xf32>
    %40 = vector.extract_strided_slice %2 {offsets = [5, 0], sizes = [20, 8], strides = [1, 1]} : vector<30x32xf32> to vector<20x8xf32>
    %41 = arith.truncf %40 : vector<20x8xf32> to vector<20x8xbf16>
    %c6 = arith.constant 6 : index
    %c0_21 = arith.constant 0 : index
    %c0_22 = arith.constant 0 : index
    %42 = vector.load %arg2[%c6, %c0_21, %c0_22] : memref<9x8x128xbf16, #tpu.memory_space<vmem>>, vector<1x8x128xbf16>
    %43 = vector.shape_cast %42 : vector<1x8x128xbf16> to vector<8x128xbf16>
    %cst_23 = arith.constant dense<0.000000e+00> : vector<20x128xf32>
    %44 = tpu.matmul %41, %43, %cst_23 {dimension_numbers = #tpu.dot_dimension_numbers<[1], [0], [0], [1], [0, 0, 1, 1], [], []>} : vector<20x8xbf16>, vector<8x128xbf16>, vector<20x128xf32> -> vector<20x128xf32>
    %45 = arith.addf %39, %44 : vector<20x128xf32>
    %46 = vector.extract_strided_slice %2 {offsets = [5, 8], sizes = [20, 8], strides = [1, 1]} : vector<30x32xf32> to vector<20x8xf32>
    %47 = arith.truncf %46 : vector<20x8xf32> to vector<20x8xbf16>
    %c7 = arith.constant 7 : index
    %c0_24 = arith.constant 0 : index
    %c0_25 = arith.constant 0 : index
    %48 = vector.load %arg2[%c7, %c0_24, %c0_25] : memref<9x8x128xbf16, #tpu.memory_space<vmem>>, vector<1x8x128xbf16>
    %49 = vector.shape_cast %48 : vector<1x8x128xbf16> to vector<8x128xbf16>
    %cst_26 = arith.constant dense<0.000000e+00> : vector<20x128xf32>
    %50 = tpu.matmul %47, %49, %cst_26 {dimension_numbers = #tpu.dot_dimension_numbers<[1], [0], [0], [1], [0, 0, 1, 1], [], []>} : vector<20x8xbf16>, vector<8x128xbf16>, vector<20x128xf32> -> vector<20x128xf32>
    %51 = arith.addf %45, %50 : vector<20x128xf32>
    %52 = vector.extract_strided_slice %2 {offsets = [6, 0], sizes = [20, 8], strides = [1, 1]} : vector<30x32xf32> to vector<20x8xf32>
    %53 = arith.truncf %52 : vector<20x8xf32> to vector<20x8xbf16>
    %c8 = arith.constant 8 : index
    %c0_27 = arith.constant 0 : index
    %c0_28 = arith.constant 0 : index
    %54 = vector.load %arg2[%c8, %c0_27, %c0_28] : memref<9x8x128xbf16, #tpu.memory_space<vmem>>, vector<1x8x128xbf16>
    %55 = vector.shape_cast %54 : vector<1x8x128xbf16> to vector<8x128xbf16>
    %cst_29 = arith.constant dense<0.000000e+00> : vector<20x128xf32>
    %56 = tpu.matmul %53, %55, %cst_29 {dimension_numbers = #tpu.dot_dimension_numbers<[1], [0], [0], [1], [0, 0, 1, 1], [], []>} : vector<20x8xbf16>, vector<8x128xbf16>, vector<20x128xf32> -> vector<20x128xf32>
    %57 = arith.addf %51, %56 : vector<20x128xf32>
    %c0_30 = arith.constant 0 : index
    %c0_31 = arith.constant 0 : index
    %58 = vector.load %arg3[%c0_30, %c0_31] : memref<1x128xf32, #tpu.memory_space<vmem>>, vector<1x128xf32>
    %59 = vector.broadcast %58 : vector<1x128xf32> to vector<20x128xf32>
    %60 = arith.addf %57, %59 : vector<20x128xf32>
    %cst_32 = arith.constant 0.000000e+00 : f32
    %61 = vector.broadcast %cst_32 : f32 to vector<20x128xf32>
    %62 = arith.maximumf %60, %61 : vector<20x128xf32>
    %c0_33 = arith.constant 0 : index
    %c0_34 = arith.constant 0 : index
    %63 = vector.load %arg4[%c0_33, %c0_34] : memref<1x128xf32, #tpu.memory_space<vmem>>, vector<1x128xf32>
    %64 = vector.broadcast %63 : vector<1x128xf32> to vector<20x128xf32>
    %65 = arith.mulf %62, %64 : vector<20x128xf32>
    %c0_35 = arith.constant 0 : index
    %c0_36 = arith.constant 0 : index
    %66 = vector.load %arg5[%c0_35, %c0_36] : memref<1x128xf32, #tpu.memory_space<vmem>>, vector<1x128xf32>
    %67 = vector.broadcast %66 : vector<1x128xf32> to vector<20x128xf32>
    %68 = arith.addf %65, %67 : vector<20x128xf32>
    %69 = arith.truncf %68 : vector<20x128xf32> to vector<20x128xbf16>
    %c0_37 = arith.constant 0 : index
    %c0_38 = arith.constant 0 : index
    %c0_39 = arith.constant 0 : index
    %70 = vector.load %arg6[%c0_37, %c0_38, %c0_39] : memref<1x20x128xbf16, #tpu.memory_space<vmem>>, vector<1x20x128xbf16>
    %71 = vector.shape_cast %70 : vector<1x20x128xbf16> to vector<20x128xbf16>
    %72 = vector.shape_cast %69 : vector<20x128xbf16> to vector<1x20x128xbf16>
    tpu.vector_store %arg6[%c0_37, %c0_38, %c0_39], %72 {strides = array<i32>} : memref<1x20x128xbf16, #tpu.memory_space<vmem>>, vector<1x20x128xbf16>,
    return
  }
  func.func @transform_0(%arg0: i32) -> (i32, i32, i32) {
    %c0_i32 = arith.constant 0 : i32
    %c0_i32_0 = arith.constant 0 : i32
    %c0_i32_1 = arith.constant 0 : i32
    return %arg0, %c0_i32, %c0_i32_0 : i32, i32, i32
  }
  func.func @transform_1(%arg0: i32) -> (i32, i32, i32) {
    %c0_i32 = arith.constant 0 : i32
    %c0_i32_0 = arith.constant 0 : i32
    %c0_i32_1 = arith.constant 0 : i32
    %c0_i32_2 = arith.constant 0 : i32
    return %c0_i32, %c0_i32_0, %c0_i32_1 : i32, i32, i32
  }
  func.func @transform_2(%arg0: i32) -> (i32, i32) {
    %c0_i32 = arith.constant 0 : i32
    %c0_i32_0 = arith.constant 0 : i32
    %c0_i32_1 = arith.constant 0 : i32
    return %c0_i32, %c0_i32_0 : i32, i32
  }
  func.func @transform_3(%arg0: i32) -> (i32, i32) {
    %c0_i32 = arith.constant 0 : i32
    %c0_i32_0 = arith.constant 0 : i32
    %c0_i32_1 = arith.constant 0 : i32
    return %c0_i32, %c0_i32_0 : i32, i32
  }
  func.func @transform_4(%arg0: i32) -> (i32, i32) {
    %c0_i32 = arith.constant 0 : i32
    %c0_i32_0 = arith.constant 0 : i32
    %c0_i32_1 = arith.constant 0 : i32
    return %c0_i32, %c0_i32_0 : i32, i32
  }
  func.func @transform_5(%arg0: i32) -> (i32, i32, i32) {
    %c0_i32 = arith.constant 0 : i32
    %c0_i32_0 = arith.constant 0 : i32
    %c0_i32_1 = arith.constant 0 : i32
    return %arg0, %c0_i32, %c0_i32_0 : i32, i32, i32
  }
}

module attributes {stable_mosaic.version = 11 : i64} {
  func.func @_fc_kernel(%arg0: i32, %arg1: memref<2x256xbf16, #tpu.memory_space<vmem>>, %arg2: memref<256x128xbf16, #tpu.memory_space<vmem>>, %arg3: memref<1x128xf32, #tpu.memory_space<vmem>>, %arg4: memref<2x128xf32, #tpu.memory_space<vmem>>, %arg5: memref<2x128xf32, #tpu.memory_space<vmem>>) attributes {dimension_semantics = [#tpu.dimension_semantics<arbitrary>], iteration_bounds = array<i64: 1>, scalar_prefetch = 0 : i64, scratch_operands = 1 : i64, tpu.core_type = #tpu.core_type<tc>, window_params = [{transform_indices = @transform_0, window_bounds = array<i64: 2, 256>}, {transform_indices = @transform_1, window_bounds = array<i64: 256, 128>}, {pipeline_mode = #tpu.pipeline_mode<synchronous>, transform_indices = @transform_2, window_bounds = array<i64: 1, 128>}, {pipeline_mode = #tpu.pipeline_mode<synchronous>, transform_indices = @transform_3, window_bounds = array<i64: 2, 128>}]} {
    %c0_i32 = arith.constant 0 : i32
    %0 = arith.cmpi eq, %arg0, %c0_i32 : i32
    %1 = arith.extui %0 : i1 to i32
    %c0_i32_0 = arith.constant 0 : i32
    %2 = arith.cmpi ne, %1, %c0_i32_0 : i32
    scf.if %2 {
      %cst_10 = arith.constant 0.000000e+00 : f32
      %12 = vector.broadcast %cst_10 : f32 to vector<2x128xf32>
      %c0_11 = arith.constant 0 : index
      %c0_12 = arith.constant 0 : index
      %13 = vector.load %arg5[%c0_11, %c0_12] : memref<2x128xf32, #tpu.memory_space<vmem>>, vector<2x128xf32>
      tpu.vector_store %arg5[%c0_11, %c0_12], %12 {strides = array<i32>} : memref<2x128xf32, #tpu.memory_space<vmem>>, vector<2x128xf32>,
    } else {
    }
    %c0 = arith.constant 0 : index
    %c0_1 = arith.constant 0 : index
    %3 = vector.load %arg5[%c0, %c0_1] : memref<2x128xf32, #tpu.memory_space<vmem>>, vector<2x128xf32>
    %c0_2 = arith.constant 0 : index
    %c0_3 = arith.constant 0 : index
    %4 = vector.load %arg1[%c0_2, %c0_3] : memref<2x256xbf16, #tpu.memory_space<vmem>>, vector<2x256xbf16>
    %c0_4 = arith.constant 0 : index
    %c0_5 = arith.constant 0 : index
    %5 = vector.load %arg2[%c0_4, %c0_5] : memref<256x128xbf16, #tpu.memory_space<vmem>>, vector<256x128xbf16>
    %cst = arith.constant dense<0.000000e+00> : vector<2x128xf32>
    %6 = tpu.matmul %4, %5, %cst {dimension_numbers = #tpu.dot_dimension_numbers<[1], [0], [0], [1], [0, 0, 1, 1], [], []>} : vector<2x256xbf16>, vector<256x128xbf16>, vector<2x128xf32> -> vector<2x128xf32>
    %7 = arith.addf %3, %6 : vector<2x128xf32>
    %c0_6 = arith.constant 0 : index
    %c0_7 = arith.constant 0 : index
    %8 = vector.load %arg5[%c0_6, %c0_7] : memref<2x128xf32, #tpu.memory_space<vmem>>, vector<2x128xf32>
    tpu.vector_store %arg5[%c0_6, %c0_7], %7 {strides = array<i32>} : memref<2x128xf32, #tpu.memory_space<vmem>>, vector<2x128xf32>,
    %c0_i32_8 = arith.constant 0 : i32
    %9 = arith.cmpi eq, %arg0, %c0_i32_8 : i32
    %10 = arith.extui %9 : i1 to i32
    %c0_i32_9 = arith.constant 0 : i32
    %11 = arith.cmpi ne, %10, %c0_i32_9 : i32
    scf.if %11 {
      %c0_10 = arith.constant 0 : index
      %c0_11 = arith.constant 0 : index
      %12 = vector.load %arg5[%c0_10, %c0_11] : memref<2x128xf32, #tpu.memory_space<vmem>>, vector<2x128xf32>
      %c0_12 = arith.constant 0 : index
      %c0_13 = arith.constant 0 : index
      %13 = vector.load %arg3[%c0_12, %c0_13] : memref<1x128xf32, #tpu.memory_space<vmem>>, vector<1x128xf32>
      %14 = vector.broadcast %13 : vector<1x128xf32> to vector<2x128xf32>
      %15 = arith.addf %12, %14 : vector<2x128xf32>
      %c0_14 = arith.constant 0 : index
      %c0_15 = arith.constant 0 : index
      %16 = vector.load %arg4[%c0_14, %c0_15] : memref<2x128xf32, #tpu.memory_space<vmem>>, vector<2x128xf32>
      tpu.vector_store %arg4[%c0_14, %c0_15], %15 {strides = array<i32>} : memref<2x128xf32, #tpu.memory_space<vmem>>, vector<2x128xf32>,
    } else {
    }
    return
  }
  func.func @transform_0(%arg0: i32) -> (i32, i32) {
    %c0_i32 = arith.constant 0 : i32
    %c0_i32_0 = arith.constant 0 : i32
    return %c0_i32, %arg0 : i32, i32
  }
  func.func @transform_1(%arg0: i32) -> (i32, i32) {
    %c0_i32 = arith.constant 0 : i32
    %c0_i32_0 = arith.constant 0 : i32
    return %arg0, %c0_i32 : i32, i32
  }
  func.func @transform_2(%arg0: i32) -> (i32, i32) {
    %c0_i32 = arith.constant 0 : i32
    %c0_i32_0 = arith.constant 0 : i32
    %c0_i32_1 = arith.constant 0 : i32
    return %c0_i32, %c0_i32_0 : i32, i32
  }
  func.func @transform_3(%arg0: i32) -> (i32, i32) {
    %c0_i32 = arith.constant 0 : i32
    %c0_i32_0 = arith.constant 0 : i32
    %c0_i32_1 = arith.constant 0 : i32
    return %c0_i32, %c0_i32_0 : i32, i32
  }
}

</mosaic_0001>

<llo_original>
// kernel: encoder_forward.3
$region0: #{encoder_forward.3}
  #allocation0 [shape = 'u32[]', space=smem, size = 0x4, offset = 0x4, fixed_abs, tag = 'smem constant byte address 0x4 - core index']
  #allocation1 [shape = 'u32[144,128]{1,0:T(1,128)}', space=vmem, size = 0x12000, scoped, tag = 'internal scratch']
  %s0 = inlined_call_operand.vmem [shape: bf16[2,90,16], index: 0, kind: input, shape index: {}]
  %s1 = inlined_call_operand.vmem [shape: bf16[9,4,128], index: 1, kind: input, shape index: {}]
  %s2 = inlined_call_operand.vmem [shape: f32[1,128], index: 2, kind: input, shape index: {}]
  %s3 = inlined_call_operand.vmem [shape: f32[1,128], index: 3, kind: input, shape index: {}]
  %s4 = inlined_call_operand.vmem [shape: f32[1,128], index: 4, kind: input, shape index: {}]
  %s5 = inlined_call_operand.vmem [shape: bf16[2,72,128], index: 5, kind: output, shape index: {}]
  %s6 = sld [smem:[#allocation0]]
  $region53: #{encoder_forward.3} parent=0
    _
  %s8 = ssub.s32 1, %s6
  %s9 = scalar_select 0, %s8, %s6
  loop: start=0, step=1, limit=4
  $region2: #{encoder_forward.3} parent=0 // loop_pre_header
    _
  $region3: #{encoder_forward.3} parent=0 // loop_header
    %s11 = sphi 0, %s15
    %p12 = scmp.ge.s32.totalorder %s11, 4
    %s21 = sphi 0, %s23
    %s24 = sphi 0, %s21
    %s25 = sphi 0, %s24
    %s41 = sphi 0, %s25
    %s45 = sphi 0, %s45
    %s47 = sphi 0, %s45
    %s48 = sphi 0, %s47
    %s62 = sphi 0, %s48
    %s66 = sphi 0, %s66
    %s68 = sphi 0, %s66
    %s69 = sphi 0, %s68
    %s83 = sphi 0, %s69
    %s87 = sphi 0, %s87
    %s89 = sphi 0, %s87
    %s90 = sphi 0, %s89
    %s104 = sphi 0, %s90
    %s108 = sphi 0, %s108
    %s110 = sphi 0, %s108
    %s111 = sphi 0, %s110
    %s125 = sphi 0, %s111
    %s131 = sphi 0, %s133
    %s134 = sphi 0, %s131
    %s135 = sphi 0, %s134
    %s151 = sphi 0, %s135
  $region4: #{encoder_forward.3} parent=0 // loop_header_branch
    %14 = sbr.rel (%p12) target = $region8
  $region5: #{encoder_forward.3} parent=0 // loop_body
    %s16 = ssub.s32 %s11, 1
    %s17 = ssub.s32 %s11, 2
    %s18 = sadd.s32 %s11, 1
    %s19 = ssub.s32 %s11, %s18
    %p20 = scmp.eq.s32.totalorder %s19, 0
    %s22 = sadd.s32 %s21, 1
    %s23 = scalar_select %p20, %s21, %s22
    %p26 = pneg %p20
    %p27 = scmp.eq.s32.totalorder %s11, 1
    %p28 = por %p26, %p27
    %p29 = scmp.ne.s32.totalorder %s21, %s24
    %p30 = scmp.eq.s32.totalorder %s11, 0
    %p31 = por %p29, %p30
    %p32 = scmp.ne.s32.totalorder %s21, %s24
    %p33 = scmp.eq.s32.totalorder %s16, 1
    %p34 = por %p32, %p33
    %p35 = scmp.ne.s32.totalorder %s24, %s25
    %p36 = scmp.eq.s32.totalorder %s16, 0
    %p37 = por %p35, %p36
    %p38 = scmp.ne.s32.totalorder %s24, %s25
    %p39 = scmp.eq.s32.totalorder %s17, 1
    %p40 = por %p38, %p39
    %p42 = scmp.ne.s32.totalorder %s25, %s41
    %p43 = scmp.eq.s32.totalorder %s17, 0
    %p44 = por %p42, %p43
    %s46 = sadd.s32 %s45, 1
    %p49 = scmp.eq.s32.totalorder %s11, 1
    %p50 = scmp.ne.s32.totalorder %s45, %s47
    %p51 = scmp.eq.s32.totalorder %s11, 0
    %p52 = por %p50, %p51
    %p53 = scmp.ne.s32.totalorder %s45, %s47
    %p54 = scmp.eq.s32.totalorder %s16, 1
    %p55 = por %p53, %p54
    %p56 = scmp.ne.s32.totalorder %s47, %s48
    %p57 = scmp.eq.s32.totalorder %s16, 0
    %p58 = por %p56, %p57
    %p59 = scmp.ne.s32.totalorder %s47, %s48
    %p60 = scmp.eq.s32.totalorder %s17, 1
    %p61 = por %p59, %p60
    %p63 = scmp.ne.s32.totalorder %s48, %s62
    %p64 = scmp.eq.s32.totalorder %s17, 0
    %p65 = por %p63, %p64
    %s67 = sadd.s32 %s66, 1
    %p70 = scmp.eq.s32.totalorder %s11, 1
    %p71 = scmp.ne.s32.totalorder %s66, %s68
    %p72 = scmp.eq.s32.totalorder %s11, 0
    %p73 = por %p71, %p72
    %p74 = scmp.ne.s32.totalorder %s66, %s68
    %p75 = scmp.eq.s32.totalorder %s16, 1
    %p76 = por %p74, %p75
    %p77 = scmp.ne.s32.totalorder %s68, %s69
    %p78 = scmp.eq.s32.totalorder %s16, 0
    %p79 = por %p77, %p78
    %p80 = scmp.ne.s32.totalorder %s68, %s69
    %p81 = scmp.eq.s32.totalorder %s17, 1
    %p82 = por %p80, %p81
    %p84 = scmp.ne.s32.totalorder %s69, %s83
    %p85 = scmp.eq.s32.totalorder %s17, 0
    %p86 = por %p84, %p85
    %s88 = sadd.s32 %s87, 1
    %p91 = scmp.eq.s32.totalorder %s11, 1
    %p92 = scmp.ne.s32.totalorder %s87, %s89
    %p93 = scmp.eq.s32.totalorder %s11, 0
    %p94 = por %p92, %p93
    %p95 = scmp.ne.s32.totalorder %s87, %s89
    %p96 = scmp.eq.s32.totalorder %s16, 1
    %p97 = por %p95, %p96
    %p98 = scmp.ne.s32.totalorder %s89, %s90
    %p99 = scmp.eq.s32.totalorder %s16, 0
    %p100 = por %p98, %p99
    %p101 = scmp.ne.s32.totalorder %s89, %s90
    %p102 = scmp.eq.s32.totalorder %s17, 1
    %p103 = por %p101, %p102
    %p105 = scmp.ne.s32.totalorder %s90, %s104
    %p106 = scmp.eq.s32.totalorder %s17, 0
    %p107 = por %p105, %p106
    %s109 = sadd.s32 %s108, 1
    %p112 = scmp.eq.s32.totalorder %s11, 1
    %p113 = scmp.ne.s32.totalorder %s108, %s110
    %p114 = scmp.eq.s32.totalorder %s11, 0
    %p115 = por %p113, %p114
    %p116 = scmp.ne.s32.totalorder %s108, %s110
    %p117 = scmp.eq.s32.totalorder %s16, 1
    %p118 = por %p116, %p117
    %p119 = scmp.ne.s32.totalorder %s110, %s111
    %p120 = scmp.eq.s32.totalorder %s16, 0
    %p121 = por %p119, %p120
    %p122 = scmp.ne.s32.totalorder %s110, %s111
    %p123 = scmp.eq.s32.totalorder %s17, 1
    %p124 = por %p122, %p123
    %p126 = scmp.ne.s32.totalorder %s111, %s125
    %p127 = scmp.eq.s32.totalorder %s17, 0
    %p128 = por %p126, %p127
    %s129 = ssub.s32 %s11, %s18
    %p130 = scmp.eq.s32.totalorder %s129, 0
    %s132 = sadd.s32 %s131, 1
    %s133 = scalar_select %p130, %s131, %s132
    %p136 = pneg %p130
    %p137 = scmp.eq.s32.totalorder %s11, 1
    %p138 = por %p136, %p137
    %p139 = scmp.ne.s32.totalorder %s131, %s134
    %p140 = scmp.eq.s32.totalorder %s11, 0
    %p141 = por %p139, %p140
    %p142 = scmp.ne.s32.totalorder %s131, %s134
    %p143 = scmp.eq.s32.totalorder %s16, 1
    %p144 = por %p142, %p143
    %p145 = scmp.ne.s32.totalorder %s134, %s135
    %p146 = scmp.eq.s32.totalorder %s16, 0
    %p147 = por %p145, %p146
    %p148 = scmp.ne.s32.totalorder %s134, %s135
    %p149 = scmp.eq.s32.totalorder %s17, 1
    %p150 = por %p148, %p149
    %p152 = scmp.ne.s32.totalorder %s135, %s151
    %p153 = scmp.eq.s32.totalorder %s17, 0
    %p154 = por %p152, %p153
    %p155 = scmp.le.s32.totalorder 1, %s11
    %p156 = scmp.lt.s32.totalorder %s11, 3
    %p157 = pnand %p155, %p156
    %p158 = pneg %p157
    // Predicated region
    $region9: #{encoder_forward.3} parent=5 // pred_check
      _
    $region10: #{encoder_forward.3} parent=5 // pred_check_branch
      %160 = sbr.rel (%p157) target = $region12
    $region11: #{encoder_forward.3} parent=5 // pred_region
      %s161 = ssub.s32 %s11, 1
      // Predicated region
      $region13: #{encoder_forward.3} parent=11 // pred_check
        %p162 = pneg %p58
      $region14: #{encoder_forward.3} parent=11 // pred_check_branch
        %164 = sbr.rel (%p162) target = $region16
      $region15: #{encoder_forward.3} parent=11 // pred_region
        _
      $region16: #{encoder_forward.3} parent=11 // pred_fallthru
        _
      // Predicated region
      $region17: #{encoder_forward.3} parent=11 // pred_check
        %p165 = pneg %p79
      $region18: #{encoder_forward.3} parent=11 // pred_check_branch
        %167 = sbr.rel (%p165) target = $region20
      $region19: #{encoder_forward.3} parent=11 // pred_region
        _
      $region20: #{encoder_forward.3} parent=11 // pred_fallthru
        _
      // Predicated region
      $region21: #{encoder_forward.3} parent=11 // pred_check
        %p168 = pneg %p100
      $region22: #{encoder_forward.3} parent=11 // pred_check_branch
        %170 = sbr.rel (%p168) target = $region24
      $region23: #{encoder_forward.3} parent=11 // pred_region
        _
      $region24: #{encoder_forward.3} parent=11 // pred_fallthru
        _
      // Predicated region
      $region25: #{encoder_forward.3} parent=11 // pred_check
        %p171 = pneg %p121
      $region26: #{encoder_forward.3} parent=11 // pred_check_branch
        %173 = sbr.rel (%p171) target = $region28
      $region27: #{encoder_forward.3} parent=11 // pred_region
        _
      $region28: #{encoder_forward.3} parent=11 // pred_fallthru
        _
    $region12: #{encoder_forward.3} parent=5 // pred_fallthru
      _
    %p174 = scmp.lt.s32.totalorder %s11, 2
    // Predicated region
    $region29: #{encoder_forward.3} parent=5 // pred_check
      %p175 = pneg %p174
    $region30: #{encoder_forward.3} parent=5 // pred_check_branch
      %177 = sbr.rel (%p175) target = $region32
    $region31: #{encoder_forward.3} parent=5 // pred_region
      // Predicated region
      $region33: #{encoder_forward.3} parent=31 // pred_check
        %p178 = pneg %p31
      $region34: #{encoder_forward.3} parent=31 // pred_check_branch
        %180 = sbr.rel (%p178) target = $region36
      $region35: #{encoder_forward.3} parent=31 // pred_region
        %p181 = scmp.lt.s32.totalorder %s11, 1
        %s182 = scalar_select %p181, %s11, 1
        %s183 = smul.addr %s182, 12
        %s184 = smul.addr %s183, 4
        %s185 = scalar_lea.vmem %s0, %s184
      $region36: #{encoder_forward.3} parent=31 // pred_fallthru
        _
    $region32: #{encoder_forward.3} parent=5 // pred_fallthru
      _
    %p186 = scmp.le.s32.totalorder 1, %s11
    %p187 = scmp.lt.s32.totalorder %s11, 3
    %p188 = pnand %p186, %p187
    %p189 = pneg %p188
    // Predicated region
    $region37: #{encoder_forward.3} parent=5 // pred_check
      _
    $region38: #{encoder_forward.3} parent=5 // pred_check_branch
      %191 = sbr.rel (%p188) target = $region40
    $region39: #{encoder_forward.3} parent=5 // pred_region
      %s192 = ssub.s32 %s11, 1
      %p193 = scmp.lt.s32.totalorder %s16, 1
      %s194 = scalar_select %p193, %s16, 1
      %s195 = smul.addr %s194, 12
      %s196 = smul.addr %s195, 4
      %s197 = scalar_lea.vmem %s0, %s196
      %p198 = pneg %p37
      %p199 = pneg %p34
      %p200 = pneg %p58
      %p201 = pneg %p55
      %p202 = pneg %p79
      %p203 = pneg %p76
      %p204 = pneg %p100
      %p205 = pneg %p97
      %p206 = pneg %p121
      %p207 = pneg %p118
      %p208 = pneg %p147
      %p209 = pneg %p144
      %p210 = scmp.lt.s32.totalorder %s16, 1
      %s211 = scalar_select %p210, %s16, 1
      %s212 = smul.addr %s211, 9
      %s213 = smul.addr %s212, 4
      %s214 = scalar_lea.vmem %s5, %s213
      %p215 = scmp.lt.s32.totalorder %s16, 1
      %s216 = scalar_select %p215, %s16, 1
      %s217 = smul.addr %s216, 12
      %s218 = smul.addr %s217, 4
      %s219 = scalar_lea.vmem %s0, %s218
      %p220 = scmp.lt.s32.totalorder %s16, 1
      %s221 = scalar_select %p220, %s16, 1
      %s222 = smul.addr %s221, 9
      %s223 = smul.addr %s222, 4
      %s224 = scalar_lea.vmem %s5, %s223
      %v226 = vld [vmem:[%s219] sm:$0xf]
      %v227 = vld [vmem:[%s219 + $0x4] sm:$0xf]
      %v228 = vld [vmem:[%s219 + $0x8] sm:$0xf]
      %v229 = vld [vmem:[%s219 + $0xc] sm:$0xf]
      %v230 = vld [vmem:[%s219 + $0x10] sm:$0xf]
      %v231 = vld [vmem:[%s219 + $0x14] sm:$0xf]
      %v232 = vld [vmem:[%s219 + $0x18] sm:$0xf]
      %v233 = vld [vmem:[%s219 + $0x1c] sm:$0xf]
      %v234 = vld [vmem:[%s219 + $0x20] sm:$0xf]
      %v235 = vld [vmem:[%s219 + $0x24] sm:$0xf]
      %v236 = vld [vmem:[%s219 + $0x28] sm:$0xf]
      %v237 = vunpack.c.l.bf16 %v226
      %v238 = vunpack.c.l.bf16 %v227
      %v239 = vunpack.c.l.bf16 %v228
      %v240 = vunpack.c.l.bf16 %v229
      %v241 = vunpack.c.l.bf16 %v230
      %v242 = vunpack.c.l.bf16 %v231
      %v243 = vunpack.c.l.bf16 %v232
      %v244 = vunpack.c.l.bf16 %v233
      %v245 = vunpack.c.l.bf16 %v234
      %v246 = vunpack.c.l.bf16 %v235
      %v247 = vunpack.c.l.bf16 %v236
      %v248 = vpack.c.bf16 %v238, %v237
      %v249 = vpack.c.bf16 %v240, %v239
      %v250 = vpack.c.bf16 %v242, %v241
      %v251 = vpack.c.bf16 %v244, %v243
      %v252 = vpack.c.bf16 %v245, %v245
      %v253 = vld [vmem:[%s1] sm:$0x3]
      %s254 = scalar_lea.vmem %s1, 2
      %v255 = vld [vmem:[%s254] sm:$0x3]
      %261 = vrot.lane.b32.xlu0 %v248, 124
      %v262 = vpop.permute.xlu0 %261
      %263 = vrot.lane.b32.xlu0 %v249, 124
      %v264 = vpop.permute.xlu0 %263
      %265 = vrot.lane.b32.xlu0 %v250, 124
      %v266 = vpop.permute.xlu0 %265
      %267 = vrot.lane.b32.xlu0 %v251, 124
      %v268 = vpop.permute.xlu0 %267
      %269 = vrot.lane.b32.xlu0 %v252, 124
      %v270 = vpop.permute.xlu0 %269
      %vm271 = vcmask 31744
      %v273 = vsel %vm271, %v262, 0
      %v276 = vsel %vm271, %v264, 0
      %v279 = vsel %vm271, %v266, 0
      %v282 = vsel %vm271, %v268, 0
      %v285 = vsel %vm271, %v270, 0
      %vm287 = vcmask 1041408
      %v289 = vsel %vm287, %v255, 0
      %291 = vmatprep.subr.bf16.mxu0 0
      %292 = vmatpush1.bf16.msra.mxu0 0
      %293 = vmatprep.subr.bf16.mxu0 0
      %294 = vmatpush1.bf16.msra.mxu0 0
      %295 = vmatprep.subr.bf16.mxu0 0
      %296 = vmatpush1.bf16.msra.mxu0 0
      %297 = vmatprep.subr.bf16.mxu0 0
      %298 = vmatpush1.bf16.msra.mxu0 0
      %299 = vmatprep.subr.bf16.mxu0 0
      %300 = vmatpush1.bf16.msra.mxu0 0
      %301 = vmatprep.subr.bf16.mxu0 0
      %302 = vmatpush1.bf16.msra.mxu0 0
      %303 = vmatprep.subr.bf16.mxu0 0
      %304 = vmatpush1.bf16.msra.mxu0 0
      %305 = vmatprep.subr.bf16.mxu0 0
      %306 = vmatpush1.bf16.msra.mxu0 %v289
      %307 = vmatprep.subr.bf16.mxu0 0
      %308 = vmatpush2.bf16.msra.mxu0 0
      %309 = vmatprep.subr.bf16.mxu0 0
      %310 = vmatpush2.bf16.msra.mxu0 0
      %311 = vmatprep.subr.bf16.mxu0 0
      %312 = vmatpush2.bf16.msra.mxu0 0
      %313 = vmatprep.subr.bf16.mxu0 0
      %314 = vmatpush2.bf16.msra.mxu0 0
      %315 = vmatprep.subr.bf16.mxu0 0
      %316 = vmatpush2.bf16.msra.mxu0 0
      %317 = vmatprep.subr.bf16.mxu0 0
      %318 = vmatpush2.bf16.msra.mxu0 0
      %319 = vmatprep.subr.bf16.mxu0 0
      %320 = vmatpush2.bf16.msra.mxu0 0
      %321 = vmatprep.subr.bf16.mxu0 0
      %322 = vmatpush2.bf16.msra.mxu0 0
      %323 = vmatprep.mubr.bf16.mxu0 0
      %324 = vmatmul.mubr.bf16.gmra.mxu0 %v273
      %v325 = vpop.f32.mrf.mxu0
      %v326 = vadd.f32 0.0, %v325
      %v327 = vpop.f32.mrf.mxu0
      %v328 = vpop.f32.mrf.mxu0
      %v329 = vadd.f32 0.0, %v328
      %v330 = vpop.f32.mrf.mxu0
      %331 = vmatprep.mubr.bf16.mxu0 0
      %332 = vmatmul.mubr.bf16.gmra.mxu0 %v276
      %v333 = vpop.f32.mrf.mxu0
      %v334 = vadd.f32 0.0, %v333
      %v335 = vpop.f32.mrf.mxu0
      %v336 = vpop.f32.mrf.mxu0
      %v337 = vadd.f32 0.0, %v336
      %v338 = vpop.f32.mrf.mxu0
      %339 = vmatprep.mubr.bf16.mxu0 0
      %340 = vmatmul.mubr.bf16.gmra.mxu0 %v279
      %v341 = vpop.f32.mrf.mxu0
      %v342 = vadd.f32 0.0, %v341
      %v343 = vpop.f32.mrf.mxu0
      %v344 = vpop.f32.mrf.mxu0
      %v345 = vadd.f32 0.0, %v344
      %v346 = vpop.f32.mrf.mxu0
      %347 = vmatprep.mubr.bf16.mxu0 0
      %348 = vmatmul.mubr.bf16.gmra.mxu0 %v282
      %v349 = vpop.f32.mrf.mxu0
      %v350 = vadd.f32 0.0, %v349
      %v351 = vpop.f32.mrf.mxu0
      %v352 = vpop.f32.mrf.mxu0
      %v353 = vadd.f32 0.0, %v352
      %v354 = vpop.f32.mrf.mxu0
      %355 = vmatprep.mubr.bf16.mxu0 0
      %356 = vmatmul.mubr.bf16.gmra.mxu0 %v285
      %v357 = vpop.f32.mrf.mxu0
      %v358 = vadd.f32 0.0, %v357
      %v359 = vpop.f32.mrf.mxu0
      %v360 = vpop.f32.mrf.mxu0
      %v361 = vpop.f32.mrf.mxu0
      %362 = vdwg.mxu0
      %v364 = vsel %vm271, %v248, 0
      %v367 = vsel %vm271, %v249, 0
      %v370 = vsel %vm271, %v250, 0
      %v373 = vsel %vm271, %v251, 0
      %v376 = vsel %vm271, %v252, 0
      %v379 = vsel %vm287, %v253, 0
      %381 = vmatprep.subr.bf16.mxu0 0
      %382 = vmatpush1.bf16.msra.mxu0 0
      %383 = vmatprep.subr.bf16.mxu0 0
      %384 = vmatpush1.bf16.msra.mxu0 0
      %385 = vmatprep.subr.bf16.mxu0 0
      %386 = vmatpush1.bf16.msra.mxu0 0
      %387 = vmatprep.subr.bf16.mxu0 0
      %388 = vmatpush1.bf16.msra.mxu0 0
      %389 = vmatprep.subr.bf16.mxu0 0
      %390 = vmatpush1.bf16.msra.mxu0 0
      %391 = vmatprep.subr.bf16.mxu0 0
      %392 = vmatpush1.bf16.msra.mxu0 0
      %393 = vmatprep.subr.bf16.mxu0 0
      %394 = vmatpush1.bf16.msra.mxu0 0
      %395 = vmatprep.subr.bf16.mxu0 0
      %396 = vmatpush1.bf16.msra.mxu0 %v379
      %397 = vmatprep.subr.bf16.mxu0 0
      %398 = vmatpush2.bf16.msra.mxu0 0
      %399 = vmatprep.subr.bf16.mxu0 0
      %400 = vmatpush2.bf16.msra.mxu0 0
      %401 = vmatprep.subr.bf16.mxu0 0
      %402 = vmatpush2.bf16.msra.mxu0 0
      %403 = vmatprep.subr.bf16.mxu0 0
      %404 = vmatpush2.bf16.msra.mxu0 0
      %405 = vmatprep.subr.bf16.mxu0 0
      %406 = vmatpush2.bf16.msra.mxu0 0
      %407 = vmatprep.subr.bf16.mxu0 0
      %408 = vmatpush2.bf16.msra.mxu0 0
      %409 = vmatprep.subr.bf16.mxu0 0
      %410 = vmatpush2.bf16.msra.mxu0 0
      %411 = vmatprep.subr.bf16.mxu0 0
      %412 = vmatpush2.bf16.msra.mxu0 0
      %413 = vmatprep.mubr.bf16.mxu0 0
      %414 = vmatmul.mubr.bf16.gmra.mxu0 %v364
      %v415 = vpop.f32.mrf.mxu0
      %v416 = vadd.f32 %v326, %v415
      %v417 = vpop.f32.mrf.mxu0
      %v418 = vpop.f32.mrf.mxu0
      %v419 = vadd.f32 %v329, %v418
      %v420 = vpop.f32.mrf.mxu0
      %421 = vmatprep.mubr.bf16.mxu0 0
      %422 = vmatmul.mubr.bf16.gmra.mxu0 %v367
      %v423 = vpop.f32.mrf.mxu0
      %v424 = vadd.f32 %v334, %v423
      %v425 = vpop.f32.mrf.mxu0
      %v426 = vpop.f32.mrf.mxu0
      %v427 = vadd.f32 %v337, %v426
      %v428 = vpop.f32.mrf.mxu0
      %429 = vmatprep.mubr.bf16.mxu0 0
      %430 = vmatmul.mubr.bf16.gmra.mxu0 %v370
      %v431 = vpop.f32.mrf.mxu0
      %v432 = vadd.f32 %v342, %v431
      %v433 = vpop.f32.mrf.mxu0
      %v434 = vpop.f32.mrf.mxu0
      %v435 = vadd.f32 %v345, %v434
      %v436 = vpop.f32.mrf.mxu0
      %437 = vmatprep.mubr.bf16.mxu0 0
      %438 = vmatmul.mubr.bf16.gmra.mxu0 %v373
      %v439 = vpop.f32.mrf.mxu0
      %v440 = vadd.f32 %v350, %v439
      %v441 = vpop.f32.mrf.mxu0
      %v442 = vpop.f32.mrf.mxu0
      %v443 = vadd.f32 %v353, %v442
      %v444 = vpop.f32.mrf.mxu0
      %445 = vmatprep.mubr.bf16.mxu0 0
      %446 = vmatmul.mubr.bf16.gmra.mxu0 %v376
      %v447 = vpop.f32.mrf.mxu0
      %v448 = vadd.f32 %v358, %v447
      %v449 = vpop.f32.mrf.mxu0
      %v450 = vpop.f32.mrf.mxu0
      %v451 = vpop.f32.mrf.mxu0
      %452 = vdwg.mxu0
      %v453 = vpack.c.bf16 %v246, %v245
      %s454 = scalar_lea.vmem %s1, 4
      %v455 = vld [vmem:[%s454] sm:$0x3]
      %vm456 = vsmask.f32 7424
      %v457 = vshrl.u32 %v248, 16
      %v459 = vshll.u32 %v248, 16
      %v461 = vrot.slane %v459, 1
      %v462 = vor.u32 %v457, %v461
      %v463 = vshll.u32 %v249, 16
      %v465 = vrot.slane %v463, 1
      %v466 = vsel %vm456, %v462, %v465
      %v467 = vshrl.u32 %v249, 16
      %v469 = vor.u32 %v467, %v465
      %v470 = vshll.u32 %v250, 16
      %v472 = vrot.slane %v470, 1
      %v473 = vsel %vm456, %v469, %v472
      %v474 = vshrl.u32 %v250, 16
      %v476 = vor.u32 %v474, %v472
      %v477 = vshll.u32 %v251, 16
      %v479 = vrot.slane %v477, 1
      %v480 = vsel %vm456, %v476, %v479
      %v481 = vshrl.u32 %v251, 16
      %v483 = vor.u32 %v481, %v479
      %v485 = vshll.u32 %v453, 16
      %v487 = vrot.slane %v485, 1
      %v488 = vsel %vm456, %v483, %v487
      %v489 = vshrl.u32 %v453, 16
      %v491 = vor.u32 %v489, %v487
      %v493 = vsel %vm271, %v466, 0
      %v496 = vsel %vm271, %v473, 0
      %v499 = vsel %vm271, %v480, 0
      %v502 = vsel %vm271, %v488, 0
      %v505 = vsel %vm271, %v491, 0
      %v508 = vsel %vm287, %v455, 0
      %510 = vmatprep.subr.bf16.mxu0 0
      %511 = vmatpush1.bf16.msra.mxu0 0
      %512 = vmatprep.subr.bf16.mxu0 0
      %513 = vmatpush1.bf16.msra.mxu0 0
      %514 = vmatprep.subr.bf16.mxu0 0
      %515 = vmatpush1.bf16.msra.mxu0 0
      %516 = vmatprep.subr.bf16.mxu0 0
      %517 = vmatpush1.bf16.msra.mxu0 0
      %518 = vmatprep.subr.bf16.mxu0 0
      %519 = vmatpush1.bf16.msra.mxu0 0
      %520 = vmatprep.subr.bf16.mxu0 0
      %521 = vmatpush1.bf16.msra.mxu0 0
      %522 = vmatprep.subr.bf16.mxu0 0
      %523 = vmatpush1.bf16.msra.mxu0 0
      %524 = vmatprep.subr.bf16.mxu0 0
      %525 = vmatpush1.bf16.msra.mxu0 %v508
      %526 = vmatprep.subr.bf16.mxu0 0
      %527 = vmatpush2.bf16.msra.mxu0 0
      %528 = vmatprep.subr.bf16.mxu0 0
      %529 = vmatpush2.bf16.msra.mxu0 0
      %530 = vmatprep.subr.bf16.mxu0 0
      %531 = vmatpush2.bf16.msra.mxu0 0
      %532 = vmatprep.subr.bf16.mxu0 0
      %533 = vmatpush2.bf16.msra.mxu0 0
      %534 = vmatprep.subr.bf16.mxu0 0
      %535 = vmatpush2.bf16.msra.mxu0 0
      %536 = vmatprep.subr.bf16.mxu0 0
      %537 = vmatpush2.bf16.msra.mxu0 0
      %538 = vmatprep.subr.bf16.mxu0 0
      %539 = vmatpush2.bf16.msra.mxu0 0
      %540 = vmatprep.subr.bf16.mxu0 0
      %541 = vmatpush2.bf16.msra.mxu0 0
      %542 = vmatprep.mubr.bf16.mxu0 0
      %543 = vmatmul.mubr.bf16.gmra.mxu0 %v493
      %v544 = vpop.f32.mrf.mxu0
      %v545 = vadd.f32 0.0, %v544
      %v546 = vpop.f32.mrf.mxu0
      %v547 = vpop.f32.mrf.mxu0
      %v548 = vadd.f32 0.0, %v547
      %v549 = vpop.f32.mrf.mxu0
      %550 = vmatprep.mubr.bf16.mxu0 0
      %551 = vmatmul.mubr.bf16.gmra.mxu0 %v496
      %v552 = vpop.f32.mrf.mxu0
      %v553 = vadd.f32 0.0, %v552
      %v554 = vpop.f32.mrf.mxu0
      %v555 = vpop.f32.mrf.mxu0
      %v556 = vadd.f32 0.0, %v555
      %v557 = vpop.f32.mrf.mxu0
      %558 = vmatprep.mubr.bf16.mxu0 0
      %559 = vmatmul.mubr.bf16.gmra.mxu0 %v499
      %v560 = vpop.f32.mrf.mxu0
      %v561 = vadd.f32 0.0, %v560
      %v562 = vpop.f32.mrf.mxu0
      %v563 = vpop.f32.mrf.mxu0
      %v564 = vadd.f32 0.0, %v563
      %v565 = vpop.f32.mrf.mxu0
      %566 = vmatprep.mubr.bf16.mxu0 0
      %567 = vmatmul.mubr.bf16.gmra.mxu0 %v502
      %v568 = vpop.f32.mrf.mxu0
      %v569 = vadd.f32 0.0, %v568
      %v570 = vpop.f32.mrf.mxu0
      %v571 = vpop.f32.mrf.mxu0
      %v572 = vadd.f32 0.0, %v571
      %v573 = vpop.f32.mrf.mxu0
      %574 = vmatprep.mubr.bf16.mxu0 0
      %575 = vmatmul.mubr.bf16.gmra.mxu0 %v505
      %v576 = vpop.f32.mrf.mxu0
      %v577 = vadd.f32 0.0, %v576
      %v578 = vpop.f32.mrf.mxu0
      %v579 = vpop.f32.mrf.mxu0
      %v580 = vpop.f32.mrf.mxu0
      %581 = vdwg.mxu0
      %v582 = vadd.f32 %v416, %v545
      %v583 = vadd.f32 %v419, %v548
      %v584 = vadd.f32 %v424, %v553
      %v585 = vadd.f32 %v427, %v556
      %v586 = vadd.f32 %v432, %v561
      %v587 = vadd.f32 %v435, %v564
      %v588 = vadd.f32 %v440, %v569
      %v589 = vadd.f32 %v443, %v572
      %v590 = vadd.f32 %v448, %v577
      %s591 = scalar_lea.vmem %s1, 6
      %v592 = vld [vmem:[%s591] sm:$0x3]
      %593 = vrot.lane.b32.xlu0 %v248, 120
      %v594 = vpop.permute.xlu0 %593
      %595 = vrot.lane.b32.xlu0 %v249, 120
      %v596 = vpop.permute.xlu0 %595
      %597 = vrot.lane.b32.xlu0 %v250, 120
      %v598 = vpop.permute.xlu0 %597
      %599 = vrot.lane.b32.xlu0 %v251, 120
      %v600 = vpop.permute.xlu0 %599
      %601 = vrot.lane.b32.xlu0 %v252, 120
      %v602 = vpop.permute.xlu0 %601
      %v604 = vsel %vm271, %v594, 0
      %v607 = vsel %vm271, %v596, 0
      %v610 = vsel %vm271, %v598, 0
      %v613 = vsel %vm271, %v600, 0
      %v616 = vsel %vm271, %v602, 0
      %v619 = vsel %vm287, %v592, 0
      %621 = vmatprep.subr.bf16.mxu0 0
      %622 = vmatpush1.bf16.msra.mxu0 0
      %623 = vmatprep.subr.bf16.mxu0 0
      %624 = vmatpush1.bf16.msra.mxu0 0
      %625 = vmatprep.subr.bf16.mxu0 0
      %626 = vmatpush1.bf16.msra.mxu0 0
      %627 = vmatprep.subr.bf16.mxu0 0
      %628 = vmatpush1.bf16.msra.mxu0 0
      %629 = vmatprep.subr.bf16.mxu0 0
      %630 = vmatpush1.bf16.msra.mxu0 0
      %631 = vmatprep.subr.bf16.mxu0 0
      %632 = vmatpush1.bf16.msra.mxu0 0
      %633 = vmatprep.subr.bf16.mxu0 0
      %634 = vmatpush1.bf16.msra.mxu0 0
      %635 = vmatprep.subr.bf16.mxu0 0
      %636 = vmatpush1.bf16.msra.mxu0 %v619
      %637 = vmatprep.subr.bf16.mxu0 0
      %638 = vmatpush2.bf16.msra.mxu0 0
      %639 = vmatprep.subr.bf16.mxu0 0
      %640 = vmatpush2.bf16.msra.mxu0 0
      %641 = vmatprep.subr.bf16.mxu0 0
      %642 = vmatpush2.bf16.msra.mxu0 0
      %643 = vmatprep.subr.bf16.mxu0 0
      %644 = vmatpush2.bf16.msra.mxu0 0
      %645 = vmatprep.subr.bf16.mxu0 0
      %646 = vmatpush2.bf16.msra.mxu0 0
      %647 = vmatprep.subr.bf16.mxu0 0
      %648 = vmatpush2.bf16.msra.mxu0 0
      %649 = vmatprep.subr.bf16.mxu0 0
      %650 = vmatpush2.bf16.msra.mxu0 0
      %651 = vmatprep.subr.bf16.mxu0 0
      %652 = vmatpush2.bf16.msra.mxu0 0
      %653 = vmatprep.mubr.bf16.mxu0 0
      %654 = vmatmul.mubr.bf16.gmra.mxu0 %v604
      %v655 = vpop.f32.mrf.mxu0
      %v656 = vadd.f32 0.0, %v655
      %v657 = vpop.f32.mrf.mxu0
      %v658 = vpop.f32.mrf.mxu0
      %v659 = vadd.f32 0.0, %v658
      %v660 = vpop.f32.mrf.mxu0
      %661 = vmatprep.mubr.bf16.mxu0 0
      %662 = vmatmul.mubr.bf16.gmra.mxu0 %v607
      %v663 = vpop.f32.mrf.mxu0
      %v664 = vadd.f32 0.0, %v663
      %v665 = vpop.f32.mrf.mxu0
      %v666 = vpop.f32.mrf.mxu0
      %v667 = vadd.f32 0.0, %v666
      %v668 = vpop.f32.mrf.mxu0
      %669 = vmatprep.mubr.bf16.mxu0 0
      %670 = vmatmul.mubr.bf16.gmra.mxu0 %v610
      %v671 = vpop.f32.mrf.mxu0
      %v672 = vadd.f32 0.0, %v671
      %v673 = vpop.f32.mrf.mxu0
      %v674 = vpop.f32.mrf.mxu0
      %v675 = vadd.f32 0.0, %v674
      %v676 = vpop.f32.mrf.mxu0
      %677 = vmatprep.mubr.bf16.mxu0 0
      %678 = vmatmul.mubr.bf16.gmra.mxu0 %v613
      %v679 = vpop.f32.mrf.mxu0
      %v680 = vadd.f32 0.0, %v679
      %v681 = vpop.f32.mrf.mxu0
      %v682 = vpop.f32.mrf.mxu0
      %v683 = vadd.f32 0.0, %v682
      %v684 = vpop.f32.mrf.mxu0
      %685 = vmatprep.mubr.bf16.mxu0 0
      %686 = vmatmul.mubr.bf16.gmra.mxu0 %v616
      %v687 = vpop.f32.mrf.mxu0
      %v688 = vadd.f32 0.0, %v687
      %v689 = vpop.f32.mrf.mxu0
      %v690 = vpop.f32.mrf.mxu0
      %v691 = vpop.f32.mrf.mxu0
      %692 = vdwg.mxu0
      %v693 = vadd.f32 %v582, %v656
      %v694 = vadd.f32 %v583, %v659
      %v695 = vadd.f32 %v584, %v664
      %v696 = vadd.f32 %v585, %v667
      %v697 = vadd.f32 %v586, %v672
      %v698 = vadd.f32 %v587, %v675
      %v699 = vadd.f32 %v588, %v680
      %v700 = vadd.f32 %v589, %v683
      %v701 = vadd.f32 %v590, %v688
      %s702 = scalar_lea.vmem %s1, 8
      %v703 = vld [vmem:[%s702] sm:$0x3]
      %704 = vrot.lane.b32.xlu0 %v248, 116
      %v705 = vpop.permute.xlu0 %704
      %706 = vrot.lane.b32.xlu0 %v249, 116
      %v707 = vpop.permute.xlu0 %706
      %708 = vrot.lane.b32.xlu0 %v250, 116
      %v709 = vpop.permute.xlu0 %708
      %710 = vrot.lane.b32.xlu0 %v251, 116
      %v711 = vpop.permute.xlu0 %710
      %712 = vrot.lane.b32.xlu0 %v252, 116
      %v713 = vpop.permute.xlu0 %712
      %v715 = vsel %vm271, %v705, 0
      %v718 = vsel %vm271, %v707, 0
      %v721 = vsel %vm271, %v709, 0
      %v724 = vsel %vm271, %v711, 0
      %v727 = vsel %vm271, %v713, 0
      %v730 = vsel %vm287, %v703, 0
      %732 = vmatprep.subr.bf16.mxu0 0
      %733 = vmatpush1.bf16.msra.mxu0 0
      %734 = vmatprep.subr.bf16.mxu0 0
      %735 = vmatpush1.bf16.msra.mxu0 0
      %736 = vmatprep.subr.bf16.mxu0 0
      %737 = vmatpush1.bf16.msra.mxu0 0
      %738 = vmatprep.subr.bf16.mxu0 0
      %739 = vmatpush1.bf16.msra.mxu0 0
      %740 = vmatprep.subr.bf16.mxu0 0
      %741 = vmatpush1.bf16.msra.mxu0 0
      %742 = vmatprep.subr.bf16.mxu0 0
      %743 = vmatpush1.bf16.msra.mxu0 0
      %744 = vmatprep.subr.bf16.mxu0 0
      %745 = vmatpush1.bf16.msra.mxu0 0
      %746 = vmatprep.subr.bf16.mxu0 0
      %747 = vmatpush1.bf16.msra.mxu0 %v730
      %748 = vmatprep.subr.bf16.mxu0 0
      %749 = vmatpush2.bf16.msra.mxu0 0
      %750 = vmatprep.subr.bf16.mxu0 0
      %751 = vmatpush2.bf16.msra.mxu0 0
      %752 = vmatprep.subr.bf16.mxu0 0
      %753 = vmatpush2.bf16.msra.mxu0 0
      %754 = vmatprep.subr.bf16.mxu0 0
      %755 = vmatpush2.bf16.msra.mxu0 0
      %756 = vmatprep.subr.bf16.mxu0 0
      %757 = vmatpush2.bf16.msra.mxu0 0
      %758 = vmatprep.subr.bf16.mxu0 0
      %759 = vmatpush2.bf16.msra.mxu0 0
      %760 = vmatprep.subr.bf16.mxu0 0
      %761 = vmatpush2.bf16.msra.mxu0 0
      %762 = vmatprep.subr.bf16.mxu0 0
      %763 = vmatpush2.bf16.msra.mxu0 0
      %764 = vmatprep.mubr.bf16.mxu0 0
      %765 = vmatmul.mubr.bf16.gmra.mxu0 %v715
      %v766 = vpop.f32.mrf.mxu0
      %v767 = vadd.f32 0.0, %v766
      %v768 = vpop.f32.mrf.mxu0
      %v769 = vpop.f32.mrf.mxu0
      %v770 = vadd.f32 0.0, %v769
      %v771 = vpop.f32.mrf.mxu0
      %772 = vmatprep.mubr.bf16.mxu0 0
      %773 = vmatmul.mubr.bf16.gmra.mxu0 %v718
      %v774 = vpop.f32.mrf.mxu0
      %v775 = vadd.f32 0.0, %v774
      %v776 = vpop.f32.mrf.mxu0
      %v777 = vpop.f32.mrf.mxu0
      %v778 = vadd.f32 0.0, %v777
      %v779 = vpop.f32.mrf.mxu0
      %780 = vmatprep.mubr.bf16.mxu0 0
      %781 = vmatmul.mubr.bf16.gmra.mxu0 %v721
      %v782 = vpop.f32.mrf.mxu0
      %v783 = vadd.f32 0.0, %v782
      %v784 = vpop.f32.mrf.mxu0
      %v785 = vpop.f32.mrf.mxu0
      %v786 = vadd.f32 0.0, %v785
      %v787 = vpop.f32.mrf.mxu0
      %788 = vmatprep.mubr.bf16.mxu0 0
      %789 = vmatmul.mubr.bf16.gmra.mxu0 %v724
      %v790 = vpop.f32.mrf.mxu0
      %v791 = vadd.f32 0.0, %v790
      %v792 = vpop.f32.mrf.mxu0
      %v793 = vpop.f32.mrf.mxu0
      %v794 = vadd.f32 0.0, %v793
      %v795 = vpop.f32.mrf.mxu0
      %796 = vmatprep.mubr.bf16.mxu0 0
      %797 = vmatmul.mubr.bf16.gmra.mxu0 %v727
      %v798 = vpop.f32.mrf.mxu0
      %v799 = vadd.f32 0.0, %v798
      %v800 = vpop.f32.mrf.mxu0
      %v801 = vpop.f32.mrf.mxu0
      %v802 = vpop.f32.mrf.mxu0
      %803 = vdwg.mxu0
      %v804 = vadd.f32 %v693, %v767
      %v805 = vadd.f32 %v694, %v770
      %v806 = vadd.f32 %v695, %v775
      %v807 = vadd.f32 %v696, %v778
      %v808 = vadd.f32 %v697, %v783
      %v809 = vadd.f32 %v698, %v786
      %v810 = vadd.f32 %v699, %v791
      %v811 = vadd.f32 %v700, %v794
      %v812 = vadd.f32 %v701, %v799
      %s813 = scalar_lea.vmem %s1, 10
      %v814 = vld [vmem:[%s813] sm:$0x3]
      %815 = vrot.lane.b32.xlu0 %v466, 120
      %v816 = vpop.permute.xlu0 %815
      %817 = vrot.lane.b32.xlu0 %v473, 120
      %v818 = vpop.permute.xlu0 %817
      %819 = vrot.lane.b32.xlu0 %v480, 120
      %v820 = vpop.permute.xlu0 %819
      %821 = vrot.lane.b32.xlu0 %v488, 120
      %v822 = vpop.permute.xlu0 %821
      %823 = vrot.lane.b32.xlu0 %v491, 120
      %v824 = vpop.permute.xlu0 %823
      %v826 = vsel %vm271, %v816, 0
      %v829 = vsel %vm271, %v818, 0
      %v832 = vsel %vm271, %v820, 0
      %v835 = vsel %vm271, %v822, 0
      %v838 = vsel %vm271, %v824, 0
      %v841 = vsel %vm287, %v814, 0
      %843 = vmatprep.subr.bf16.mxu0 0
      %844 = vmatpush1.bf16.msra.mxu0 0
      %845 = vmatprep.subr.bf16.mxu0 0
      %846 = vmatpush1.bf16.msra.mxu0 0
      %847 = vmatprep.subr.bf16.mxu0 0
      %848 = vmatpush1.bf16.msra.mxu0 0
      %849 = vmatprep.subr.bf16.mxu0 0
      %850 = vmatpush1.bf16.msra.mxu0 0
      %851 = vmatprep.subr.bf16.mxu0 0
      %852 = vmatpush1.bf16.msra.mxu0 0
      %853 = vmatprep.subr.bf16.mxu0 0
      %854 = vmatpush1.bf16.msra.mxu0 0
      %855 = vmatprep.subr.bf16.mxu0 0
      %856 = vmatpush1.bf16.msra.mxu0 0
      %857 = vmatprep.subr.bf16.mxu0 0
      %858 = vmatpush1.bf16.msra.mxu0 %v841
      %859 = vmatprep.subr.bf16.mxu0 0
      %860 = vmatpush2.bf16.msra.mxu0 0
      %861 = vmatprep.subr.bf16.mxu0 0
      %862 = vmatpush2.bf16.msra.mxu0 0
      %863 = vmatprep.subr.bf16.mxu0 0
      %864 = vmatpush2.bf16.msra.mxu0 0
      %865 = vmatprep.subr.bf16.mxu0 0
      %866 = vmatpush2.bf16.msra.mxu0 0
      %867 = vmatprep.subr.bf16.mxu0 0
      %868 = vmatpush2.bf16.msra.mxu0 0
      %869 = vmatprep.subr.bf16.mxu0 0
      %870 = vmatpush2.bf16.msra.mxu0 0
      %871 = vmatprep.subr.bf16.mxu0 0
      %872 = vmatpush2.bf16.msra.mxu0 0
      %873 = vmatprep.subr.bf16.mxu0 0
      %874 = vmatpush2.bf16.msra.mxu0 0
      %875 = vmatprep.mubr.bf16.mxu0 0
      %876 = vmatmul.mubr.bf16.gmra.mxu0 %v826
      %v877 = vpop.f32.mrf.mxu0
      %v878 = vadd.f32 0.0, %v877
      %v879 = vpop.f32.mrf.mxu0
      %v880 = vpop.f32.mrf.mxu0
      %v881 = vadd.f32 0.0, %v880
      %v882 = vpop.f32.mrf.mxu0
      %883 = vmatprep.mubr.bf16.mxu0 0
      %884 = vmatmul.mubr.bf16.gmra.mxu0 %v829
      %v885 = vpop.f32.mrf.mxu0
      %v886 = vadd.f32 0.0, %v885
      %v887 = vpop.f32.mrf.mxu0
      %v888 = vpop.f32.mrf.mxu0
      %v889 = vadd.f32 0.0, %v888
      %v890 = vpop.f32.mrf.mxu0
      %891 = vmatprep.mubr.bf16.mxu0 0
      %892 = vmatmul.mubr.bf16.gmra.mxu0 %v832
      %v893 = vpop.f32.mrf.mxu0
      %v894 = vadd.f32 0.0, %v893
      %v895 = vpop.f32.mrf.mxu0
      %v896 = vpop.f32.mrf.mxu0
      %v897 = vadd.f32 0.0, %v896
      %v898 = vpop.f32.mrf.mxu0
      %899 = vmatprep.mubr.bf16.mxu0 0
      %900 = vmatmul.mubr.bf16.gmra.mxu0 %v835
      %v901 = vpop.f32.mrf.mxu0
      %v902 = vadd.f32 0.0, %v901
      %v903 = vpop.f32.mrf.mxu0
      %v904 = vpop.f32.mrf.mxu0
      %v905 = vadd.f32 0.0, %v904
      %v906 = vpop.f32.mrf.mxu0
      %907 = vmatprep.mubr.bf16.mxu0 0
      %908 = vmatmul.mubr.bf16.gmra.mxu0 %v838
      %v909 = vpop.f32.mrf.mxu0
      %v910 = vadd.f32 0.0, %v909
      %v911 = vpop.f32.mrf.mxu0
      %v912 = vpop.f32.mrf.mxu0
      %v913 = vpop.f32.mrf.mxu0
      %914 = vdwg.mxu0
      %v915 = vadd.f32 %v804, %v878
      %v916 = vadd.f32 %v805, %v881
      %v917 = vadd.f32 %v806, %v886
      %v918 = vadd.f32 %v807, %v889
      %v919 = vadd.f32 %v808, %v894
      %v920 = vadd.f32 %v809, %v897
      %v921 = vadd.f32 %v810, %v902
      %v922 = vadd.f32 %v811, %v905
      %v923 = vadd.f32 %v812, %v910
      %v924 = vpack.c.bf16 %v239, %v238
      %v925 = vpack.c.bf16 %v241, %v240
      %v926 = vpack.c.bf16 %v243, %v242
      %v927 = vpack.c.bf16 %v245, %v244
      %v928 = vpack.c.bf16 %v247, %v246
      %s929 = scalar_lea.vmem %s1, 12
      %v930 = vld [vmem:[%s929] sm:$0x3]
      %v932 = vshrl.u32 %v924, 16
      %v934 = vshll.u32 %v924, 16
      %v936 = vrot.slane %v934, 1
      %v937 = vor.u32 %v932, %v936
      %v939 = vshll.u32 %v925, 16
      %v941 = vrot.slane %v939, 1
      %v942 = vsel %vm456, %v937, %v941
      %v943 = vshrl.u32 %v925, 16
      %v945 = vor.u32 %v943, %v941
      %v947 = vshll.u32 %v926, 16
      %v949 = vrot.slane %v947, 1
      %v950 = vsel %vm456, %v945, %v949
      %v951 = vshrl.u32 %v926, 16
      %v953 = vor.u32 %v951, %v949
      %v955 = vshll.u32 %v927, 16
      %v957 = vrot.slane %v955, 1
      %v958 = vsel %vm456, %v953, %v957
      %v959 = vshrl.u32 %v927, 16
      %v961 = vor.u32 %v959, %v957
      %v963 = vshll.u32 %v928, 16
      %v965 = vrot.slane %v963, 1
      %v966 = vsel %vm456, %v961, %v965
      %v967 = vshrl.u32 %v928, 16
      %v969 = vor.u32 %v967, %v965
      %v971 = vsel %vm271, %v942, 0
      %v974 = vsel %vm271, %v950, 0
      %v977 = vsel %vm271, %v958, 0
      %v980 = vsel %vm271, %v966, 0
      %v983 = vsel %vm271, %v969, 0
      %v986 = vsel %vm287, %v930, 0
      %988 = vmatprep.subr.bf16.mxu0 0
      %989 = vmatpush1.bf16.msra.mxu0 0
      %990 = vmatprep.subr.bf16.mxu0 0
      %991 = vmatpush1.bf16.msra.mxu0 0
      %992 = vmatprep.subr.bf16.mxu0 0
      %993 = vmatpush1.bf16.msra.mxu0 0
      %994 = vmatprep.subr.bf16.mxu0 0
      %995 = vmatpush1.bf16.msra.mxu0 0
      %996 = vmatprep.subr.bf16.mxu0 0
      %997 = vmatpush1.bf16.msra.mxu0 0
      %998 = vmatprep.subr.bf16.mxu0 0
      %999 = vmatpush1.bf16.msra.mxu0 0
      %1000 = vmatprep.subr.bf16.mxu0 0
      %1001 = vmatpush1.bf16.msra.mxu0 0
      %1002 = vmatprep.subr.bf16.mxu0 0
      %1003 = vmatpush1.bf16.msra.mxu0 %v986
      %1004 = vmatprep.subr.bf16.mxu0 0
      %1005 = vmatpush2.bf16.msra.mxu0 0
      %1006 = vmatprep.subr.bf16.mxu0 0
      %1007 = vmatpush2.bf16.msra.mxu0 0
      %1008 = vmatprep.subr.bf16.mxu0 0
      %1009 = vmatpush2.bf16.msra.mxu0 0
      %1010 = vmatprep.subr.bf16.mxu0 0
      %1011 = vmatpush2.bf16.msra.mxu0 0
      %1012 = vmatprep.subr.bf16.mxu0 0
      %1013 = vmatpush2.bf16.msra.mxu0 0
      %1014 = vmatprep.subr.bf16.mxu0 0
      %1015 = vmatpush2.bf16.msra.mxu0 0
      %1016 = vmatprep.subr.bf16.mxu0 0
      %1017 = vmatpush2.bf16.msra.mxu0 0
      %1018 = vmatprep.subr.bf16.mxu0 0
      %1019 = vmatpush2.bf16.msra.mxu0 0
      %1020 = vmatprep.mubr.bf16.mxu0 0
      %1021 = vmatmul.mubr.bf16.gmra.mxu0 %v971
      %v1022 = vpop.f32.mrf.mxu0
      %v1023 = vadd.f32 0.0, %v1022
      %v1024 = vpop.f32.mrf.mxu0
      %v1025 = vpop.f32.mrf.mxu0
      %v1026 = vadd.f32 0.0, %v1025
      %v1027 = vpop.f32.mrf.mxu0
      %1028 = vmatprep.mubr.bf16.mxu0 0
      %1029 = vmatmul.mubr.bf16.gmra.mxu0 %v974
      %v1030 = vpop.f32.mrf.mxu0
      %v1031 = vadd.f32 0.0, %v1030
      %v1032 = vpop.f32.mrf.mxu0
      %v1033 = vpop.f32.mrf.mxu0
      %v1034 = vadd.f32 0.0, %v1033
      %v1035 = vpop.f32.mrf.mxu0
      %1036 = vmatprep.mubr.bf16.mxu0 0
      %1037 = vmatmul.mubr.bf16.gmra.mxu0 %v977
      %v1038 = vpop.f32.mrf.mxu0
      %v1039 = vadd.f32 0.0, %v1038
      %v1040 = vpop.f32.mrf.mxu0
      %v1041 = vpop.f32.mrf.mxu0
      %v1042 = vadd.f32 0.0, %v1041
      %v1043 = vpop.f32.mrf.mxu0
      %1044 = vmatprep.mubr.bf16.mxu0 0
      %1045 = vmatmul.mubr.bf16.gmra.mxu0 %v980
      %v1046 = vpop.f32.mrf.mxu0
      %v1047 = vadd.f32 0.0, %v1046
      %v1048 = vpop.f32.mrf.mxu0
      %v1049 = vpop.f32.mrf.mxu0
      %v1050 = vadd.f32 0.0, %v1049
      %v1051 = vpop.f32.mrf.mxu0
      %1052 = vmatprep.mubr.bf16.mxu0 0
      %1053 = vmatmul.mubr.bf16.gmra.mxu0 %v983
      %v1054 = vpop.f32.mrf.mxu0
      %v1055 = vadd.f32 0.0, %v1054
      %v1056 = vpop.f32.mrf.mxu0
      %v1057 = vpop.f32.mrf.mxu0
      %v1058 = vpop.f32.mrf.mxu0
      %1059 = vdwg.mxu0
      %v1060 = vadd.f32 %v915, %v1023
      %v1061 = vadd.f32 %v916, %v1026
      %v1062 = vadd.f32 %v917, %v1031
      %v1063 = vadd.f32 %v918, %v1034
      %v1064 = vadd.f32 %v919, %v1039
      %v1065 = vadd.f32 %v920, %v1042
      %v1066 = vadd.f32 %v921, %v1047
      %v1067 = vadd.f32 %v922, %v1050
      %v1068 = vadd.f32 %v923, %v1055
      %s1069 = scalar_lea.vmem %s1, 14
      %v1070 = vld [vmem:[%s1069] sm:$0x3]
      %1071 = vrot.lane.b32.xlu0 %v942, 124
      %v1072 = vpop.permute.xlu0 %1071
      %1073 = vrot.lane.b32.xlu0 %v950, 124
      %v1074 = vpop.permute.xlu0 %1073
      %1075 = vrot.lane.b32.xlu0 %v958, 124
      %v1076 = vpop.permute.xlu0 %1075
      %1077 = vrot.lane.b32.xlu0 %v966, 124
      %v1078 = vpop.permute.xlu0 %1077
      %1079 = vrot.lane.b32.xlu0 %v969, 124
      %v1080 = vpop.permute.xlu0 %1079
      %v1082 = vsel %vm271, %v1072, 0
      %v1085 = vsel %vm271, %v1074, 0
      %v1088 = vsel %vm271, %v1076, 0
      %v1091 = vsel %vm271, %v1078, 0
      %v1094 = vsel %vm271, %v1080, 0
      %v1097 = vsel %vm287, %v1070, 0
      %1099 = vmatprep.subr.bf16.mxu0 0
      %1100 = vmatpush1.bf16.msra.mxu0 0
      %1101 = vmatprep.subr.bf16.mxu0 0
      %1102 = vmatpush1.bf16.msra.mxu0 0
      %1103 = vmatprep.subr.bf16.mxu0 0
      %1104 = vmatpush1.bf16.msra.mxu0 0
      %1105 = vmatprep.subr.bf16.mxu0 0
      %1106 = vmatpush1.bf16.msra.mxu0 0
      %1107 = vmatprep.subr.bf16.mxu0 0
      %1108 = vmatpush1.bf16.msra.mxu0 0
      %1109 = vmatprep.subr.bf16.mxu0 0
      %1110 = vmatpush1.bf16.msra.mxu0 0
      %1111 = vmatprep.subr.bf16.mxu0 0
      %1112 = vmatpush1.bf16.msra.mxu0 0
      %1113 = vmatprep.subr.bf16.mxu0 0
      %1114 = vmatpush1.bf16.msra.mxu0 %v1097
      %1115 = vmatprep.subr.bf16.mxu0 0
      %1116 = vmatpush2.bf16.msra.mxu0 0
      %1117 = vmatprep.subr.bf16.mxu0 0
      %1118 = vmatpush2.bf16.msra.mxu0 0
      %1119 = vmatprep.subr.bf16.mxu0 0
      %1120 = vmatpush2.bf16.msra.mxu0 0
      %1121 = vmatprep.subr.bf16.mxu0 0
      %1122 = vmatpush2.bf16.msra.mxu0 0
      %1123 = vmatprep.subr.bf16.mxu0 0
      %1124 = vmatpush2.bf16.msra.mxu0 0
      %1125 = vmatprep.subr.bf16.mxu0 0
      %1126 = vmatpush2.bf16.msra.mxu0 0
      %1127 = vmatprep.subr.bf16.mxu0 0
      %1128 = vmatpush2.bf16.msra.mxu0 0
      %1129 = vmatprep.subr.bf16.mxu0 0
      %1130 = vmatpush2.bf16.msra.mxu0 0
      %1131 = vmatprep.mubr.bf16.mxu0 0
      %1132 = vmatmul.mubr.bf16.gmra.mxu0 %v1082
      %v1133 = vpop.f32.mrf.mxu0
      %v1134 = vadd.f32 0.0, %v1133
      %v1135 = vpop.f32.mrf.mxu0
      %v1136 = vpop.f32.mrf.mxu0
      %v1137 = vadd.f32 0.0, %v1136
      %v1138 = vpop.f32.mrf.mxu0
      %1139 = vmatprep.mubr.bf16.mxu0 0
      %1140 = vmatmul.mubr.bf16.gmra.mxu0 %v1085
      %v1141 = vpop.f32.mrf.mxu0
      %v1142 = vadd.f32 0.0, %v1141
      %v1143 = vpop.f32.mrf.mxu0
      %v1144 = vpop.f32.mrf.mxu0
      %v1145 = vadd.f32 0.0, %v1144
      %v1146 = vpop.f32.mrf.mxu0
      %1147 = vmatprep.mubr.bf16.mxu0 0
      %1148 = vmatmul.mubr.bf16.gmra.mxu0 %v1088
      %v1149 = vpop.f32.mrf.mxu0
      %v1150 = vadd.f32 0.0, %v1149
      %v1151 = vpop.f32.mrf.mxu0
      %v1152 = vpop.f32.mrf.mxu0
      %v1153 = vadd.f32 0.0, %v1152
      %v1154 = vpop.f32.mrf.mxu0
      %1155 = vmatprep.mubr.bf16.mxu0 0
      %1156 = vmatmul.mubr.bf16.gmra.mxu0 %v1091
      %v1157 = vpop.f32.mrf.mxu0
      %v1158 = vadd.f32 0.0, %v1157
      %v1159 = vpop.f32.mrf.mxu0
      %v1160 = vpop.f32.mrf.mxu0
      %v1161 = vadd.f32 0.0, %v1160
      %v1162 = vpop.f32.mrf.mxu0
      %1163 = vmatprep.mubr.bf16.mxu0 0
      %1164 = vmatmul.mubr.bf16.gmra.mxu0 %v1094
      %v1165 = vpop.f32.mrf.mxu0
      %v1166 = vadd.f32 0.0, %v1165
      %v1167 = vpop.f32.mrf.mxu0
      %v1168 = vpop.f32.mrf.mxu0
      %v1169 = vpop.f32.mrf.mxu0
      %1170 = vdwg.mxu0
      %v1171 = vadd.f32 %v1060, %v1134
      %v1172 = vadd.f32 %v1061, %v1137
      %v1173 = vadd.f32 %v1062, %v1142
      %v1174 = vadd.f32 %v1063, %v1145
      %v1175 = vadd.f32 %v1064, %v1150
      %v1176 = vadd.f32 %v1065, %v1153
      %v1177 = vadd.f32 %v1066, %v1158
      %v1178 = vadd.f32 %v1067, %v1161
      %v1179 = vadd.f32 %v1068, %v1166
      %s1180 = scalar_lea.vmem %s1, 16
      %v1181 = vld [vmem:[%s1180] sm:$0x3]
      %vm1187 = vcmask 1046528
      %v1188 = vrot.slane %v924, 1
      %v1189 = vrot.slane %v925, 1
      %v1190 = vsel %vm1187, %v1188, %v1189
      %v1191 = vrot.slane %v926, 1
      %v1192 = vsel %vm1187, %v1189, %v1191
      %v1193 = vrot.slane %v927, 1
      %v1194 = vsel %vm1187, %v1191, %v1193
      %v1195 = vrot.slane %v928, 1
      %v1196 = vsel %vm1187, %v1193, %v1195
      %v1198 = vsel %vm271, %v1190, 0
      %v1201 = vsel %vm271, %v1192, 0
      %v1204 = vsel %vm271, %v1194, 0
      %v1207 = vsel %vm271, %v1196, 0
      %v1210 = vsel %vm271, %v1195, 0
      %v1213 = vsel %vm287, %v1181, 0
      %1215 = vmatprep.subr.bf16.mxu0 0
      %1216 = vmatpush1.bf16.msra.mxu0 0
      %1217 = vmatprep.subr.bf16.mxu0 0
      %1218 = vmatpush1.bf16.msra.mxu0 0
      %1219 = vmatprep.subr.bf16.mxu0 0
      %1220 = vmatpush1.bf16.msra.mxu0 0
      %1221 = vmatprep.subr.bf16.mxu0 0
      %1222 = vmatpush1.bf16.msra.mxu0 0
      %1223 = vmatprep.subr.bf16.mxu0 0
      %1224 = vmatpush1.bf16.msra.mxu0 0
      %1225 = vmatprep.subr.bf16.mxu0 0
      %1226 = vmatpush1.bf16.msra.mxu0 0
      %1227 = vmatprep.subr.bf16.mxu0 0
      %1228 = vmatpush1.bf16.msra.mxu0 0
      %1229 = vmatprep.subr.bf16.mxu0 0
      %1230 = vmatpush1.bf16.msra.mxu0 %v1213
      %1231 = vmatprep.subr.bf16.mxu0 0
      %1232 = vmatpush2.bf16.msra.mxu0 0
      %1233 = vmatprep.subr.bf16.mxu0 0
      %1234 = vmatpush2.bf16.msra.mxu0 0
      %1235 = vmatprep.subr.bf16.mxu0 0
      %1236 = vmatpush2.bf16.msra.mxu0 0
      %1237 = vmatprep.subr.bf16.mxu0 0
      %1238 = vmatpush2.bf16.msra.mxu0 0
      %1239 = vmatprep.subr.bf16.mxu0 0
      %1240 = vmatpush2.bf16.msra.mxu0 0
      %1241 = vmatprep.subr.bf16.mxu0 0
      %1242 = vmatpush2.bf16.msra.mxu0 0
      %1243 = vmatprep.subr.bf16.mxu0 0
      %1244 = vmatpush2.bf16.msra.mxu0 0
      %1245 = vmatprep.subr.bf16.mxu0 0
      %1246 = vmatpush2.bf16.msra.mxu0 0
      %1247 = vmatprep.mubr.bf16.mxu0 0
      %1248 = vmatmul.mubr.bf16.gmra.mxu0 %v1198
      %v1249 = vpop.f32.mrf.mxu0
      %v1250 = vadd.f32 0.0, %v1249
      %v1251 = vpop.f32.mrf.mxu0
      %v1252 = vpop.f32.mrf.mxu0
      %v1253 = vadd.f32 0.0, %v1252
      %v1254 = vpop.f32.mrf.mxu0
      %1255 = vmatprep.mubr.bf16.mxu0 0
      %1256 = vmatmul.mubr.bf16.gmra.mxu0 %v1201
      %v1257 = vpop.f32.mrf.mxu0
      %v1258 = vadd.f32 0.0, %v1257
      %v1259 = vpop.f32.mrf.mxu0
      %v1260 = vpop.f32.mrf.mxu0
      %v1261 = vadd.f32 0.0, %v1260
      %v1262 = vpop.f32.mrf.mxu0
      %1263 = vmatprep.mubr.bf16.mxu0 0
      %1264 = vmatmul.mubr.bf16.gmra.mxu0 %v1204
      %v1265 = vpop.f32.mrf.mxu0
      %v1266 = vadd.f32 0.0, %v1265
      %v1267 = vpop.f32.mrf.mxu0
      %v1268 = vpop.f32.mrf.mxu0
      %v1269 = vadd.f32 0.0, %v1268
      %v1270 = vpop.f32.mrf.mxu0
      %1271 = vmatprep.mubr.bf16.mxu0 0
      %1272 = vmatmul.mubr.bf16.gmra.mxu0 %v1207
      %v1273 = vpop.f32.mrf.mxu0
      %v1274 = vadd.f32 0.0, %v1273
      %v1275 = vpop.f32.mrf.mxu0
      %v1276 = vpop.f32.mrf.mxu0
      %v1277 = vadd.f32 0.0, %v1276
      %v1278 = vpop.f32.mrf.mxu0
      %1279 = vmatprep.mubr.bf16.mxu0 0
      %1280 = vmatmul.mubr.bf16.gmra.mxu0 %v1210
      %v1281 = vpop.f32.mrf.mxu0
      %v1282 = vadd.f32 0.0, %v1281
      %v1283 = vpop.f32.mrf.mxu0
      %v1284 = vpop.f32.mrf.mxu0
      %v1285 = vpop.f32.mrf.mxu0
      %1286 = vdwg.mxu0
      %v1287 = vadd.f32 %v1171, %v1250
      %v1288 = vadd.f32 %v1172, %v1253
      %v1289 = vadd.f32 %v1173, %v1258
      %v1290 = vadd.f32 %v1174, %v1261
      %v1291 = vadd.f32 %v1175, %v1266
      %v1292 = vadd.f32 %v1176, %v1269
      %v1293 = vadd.f32 %v1177, %v1274
      %v1294 = vadd.f32 %v1178, %v1277
      %v1295 = vadd.f32 %v1179, %v1282
      %v1296 = vld [vmem:[%s2] sm:$0x1]
      %v1298 = vlaneseq
      %v1299 = vshrl.u32 %v1298, 7
      %v1300 = vsub.s32 0, %v1299
      %v1301 = vrot.slane %v1296, %v1300
      %v1303 = vadd.f32 %v1287, %v1301
      %v1304 = vadd.f32 %v1288, %v1301
      %v1305 = vadd.f32 %v1289, %v1301
      %v1306 = vadd.f32 %v1290, %v1301
      %v1307 = vadd.f32 %v1291, %v1301
      %v1308 = vadd.f32 %v1292, %v1301
      %v1309 = vadd.f32 %v1293, %v1301
      %v1310 = vadd.f32 %v1294, %v1301
      %v1311 = vadd.f32 %v1295, %v1301
      %v1312 = vmax.f32 %v1303, 0.0
      %v1313 = vmax.f32 %v1304, 0.0
      %v1314 = vmax.f32 %v1305, 0.0
      %v1315 = vmax.f32 %v1306, 0.0
      %v1316 = vmax.f32 %v1307, 0.0
      %v1317 = vmax.f32 %v1308, 0.0
      %v1318 = vmax.f32 %v1309, 0.0
      %v1319 = vmax.f32 %v1310, 0.0
      %v1320 = vmax.f32 %v1311, 0.0
      %v1321 = vld [vmem:[%s3] sm:$0x1]
      %v1323 = vlaneseq
      %v1324 = vshrl.u32 %v1323, 7
      %v1325 = vsub.s32 0, %v1324
      %v1326 = vrot.slane %v1321, %v1325
      %v1328 = vmul.f32 %v1312, %v1326
      %v1329 = vmul.f32 %v1313, %v1326
      %v1330 = vmul.f32 %v1314, %v1326
      %v1331 = vmul.f32 %v1315, %v1326
      %v1332 = vmul.f32 %v1316, %v1326
      %v1333 = vmul.f32 %v1317, %v1326
      %v1334 = vmul.f32 %v1318, %v1326
      %v1335 = vmul.f32 %v1319, %v1326
      %v1336 = vmul.f32 %v1320, %v1326
      %v1337 = vld [vmem:[%s4] sm:$0x1]
      %v1339 = vlaneseq
      %v1340 = vshrl.u32 %v1339, 7
      %v1341 = vsub.s32 0, %v1340
      %v1342 = vrot.slane %v1337, %v1341
      %v1344 = vadd.f32 %v1328, %v1342
      %v1345 = vadd.f32 %v1329, %v1342
      %v1346 = vadd.f32 %v1330, %v1342
      %v1347 = vadd.f32 %v1331, %v1342
      %v1348 = vadd.f32 %v1332, %v1342
      %v1349 = vadd.f32 %v1333, %v1342
      %v1350 = vadd.f32 %v1334, %v1342
      %v1351 = vadd.f32 %v1335, %v1342
      %v1352 = vadd.f32 %v1336, %v1342
      %v1353 = vpack.c.bf16 %v1345, %v1344
      %v1354 = vpack.c.bf16 %v1347, %v1346
      %v1355 = vpack.c.bf16 %v1349, %v1348
      %v1356 = vpack.c.bf16 %v1351, %v1350
      %v1357 = vpack.c.bf16 %v1352, %v1352
      %v1363 = vunpack.c.l.b16 %v1353
      %v1364 = vunpack.c.h.b16 %v1353
      %v1365 = vunpack.c.l.b16 %v1354
      %v1366 = vunpack.c.h.b16 %v1354
      %v1367 = vunpack.c.l.b16 %v1355
      %v1368 = vunpack.c.h.b16 %v1355
      %v1369 = vunpack.c.l.b16 %v1356
      %v1370 = vunpack.c.h.b16 %v1356
      %v1371 = vunpack.c.l.b16 %v1357
      %v1372 = vpack.c.b16 %v1363, %v1363
      %v1373 = vpack.c.b16 %v1364, %v1364
      %v1374 = vpack.c.b16 %v1365, %v1365
      %v1375 = vpack.c.b16 %v1366, %v1366
      %v1376 = vpack.c.b16 %v1367, %v1367
      %v1377 = vpack.c.b16 %v1368, %v1368
      %v1378 = vpack.c.b16 %v1369, %v1369
      %v1379 = vpack.c.b16 %v1370, %v1370
      %v1380 = vpack.c.b16 %v1371, %v1371
      %1390 = vst [vmem:[%s224] sm:$0xf] %v1372
      %1391 = vst [vmem:[%s224 + $0x4] sm:$0xf] %v1373
      %1392 = vst [vmem:[%s224 + $0x8] sm:$0xf] %v1374
      %1393 = vst [vmem:[%s224 + $0xc] sm:$0xf] %v1375
      %1394 = vst [vmem:[%s224 + $0x10] sm:$0xf] %v1376
      %1395 = vst [vmem:[%s224 + $0x14] sm:$0xf] %v1377
      %1396 = vst [vmem:[%s224 + $0x18] sm:$0xf] %v1378
      %1397 = vst [vmem:[%s224 + $0x1c] sm:$0xf] %v1379
      %1398 = vst [vmem:[%s224 + $0x20] sm:$0xf] %v1380
      %p1399 = scmp.lt.s32.totalorder %s16, 1
      %s1400 = scalar_select %p1399, %s16, 1
      %s1401 = smul.addr %s1400, 9
      %s1402 = smul.addr %s1401, 4
      %s1403 = scalar_lea.vmem %s5, %s1402
      // Predicated region
      $region41: #{encoder_forward.3} parent=39 // pred_check
        %p1404 = pneg %p144
      $region42: #{encoder_forward.3} parent=39 // pred_check_branch
        %1406 = sbr.rel (%p1404) target = $region44
      $region43: #{encoder_forward.3} parent=39 // pred_region
        _
      $region44: #{encoder_forward.3} parent=39 // pred_fallthru
        _
    $region40: #{encoder_forward.3} parent=5 // pred_fallthru
      _
    %p1407 = scmp.le.s32.totalorder 2, %s11
    // Predicated region
    $region45: #{encoder_forward.3} parent=5 // pred_check
      %p1408 = pneg %p1407
    $region46: #{encoder_forward.3} parent=5 // pred_check_branch
      %1410 = sbr.rel (%p1408) target = $region48
    $region47: #{encoder_forward.3} parent=5 // pred_region
      %s1411 = ssub.s32 %s11, 2
      // Predicated region
      $region49: #{encoder_forward.3} parent=47 // pred_check
        %p1412 = pneg %p150
      $region50: #{encoder_forward.3} parent=47 // pred_check_branch
        %1414 = sbr.rel (%p1412) target = $region52
      $region51: #{encoder_forward.3} parent=47 // pred_region
        %p1415 = scmp.lt.s32.totalorder %s17, 1
        %s1416 = scalar_select %p1415, %s17, 1
        %s1417 = smul.addr %s1416, 9
        %s1418 = smul.addr %s1417, 4
        %s1419 = scalar_lea.vmem %s5, %s1418
      $region52: #{encoder_forward.3} parent=47 // pred_fallthru
        _
    $region48: #{encoder_forward.3} parent=5 // pred_fallthru
      _
  $region6: #{encoder_forward.3} parent=0 // loop_footer
    %s15 = sadd.s32 1, %s11
  $region7: #{encoder_forward.3} parent=0 // loop_footer_branch
    %10 = sbr.rel target = $region3
  $region8: #{encoder_forward.3} parent=0 // loop_exit
    _

// kernel: encoder_forward.4
$region0: #{encoder_forward.4}
  #allocation0 [shape = 'u32[]', space=smem, size = 0x4, offset = 0x4, fixed_abs, tag = 'smem constant byte address 0x4 - core index']
  #allocation1 [shape = 'u32[144,128]{1,0:T(1,128)}', space=vmem, size = 0x12000, scoped, tag = 'internal scratch']
  %s0 = inlined_call_operand.vmem [shape: bf16[2,30,32], index: 0, kind: input, shape index: {}]
  %s1 = inlined_call_operand.vmem [shape: bf16[9,8,128], index: 1, kind: input, shape index: {}]
  %s2 = inlined_call_operand.vmem [shape: f32[1,128], index: 2, kind: input, shape index: {}]
  %s3 = inlined_call_operand.vmem [shape: f32[1,128], index: 3, kind: input, shape index: {}]
  %s4 = inlined_call_operand.vmem [shape: f32[1,128], index: 4, kind: input, shape index: {}]
  %s5 = inlined_call_operand.vmem [shape: bf16[2,20,128], index: 5, kind: output, shape index: {}]
  %s6 = sld [smem:[#allocation0]]
  $region53: #{encoder_forward.4} parent=0
    _
  %s8 = ssub.s32 1, %s6
  %s9 = scalar_select 0, %s8, %s6
  loop: start=0, step=1, limit=4
  $region2: #{encoder_forward.4} parent=0 // loop_pre_header
    _
  $region3: #{encoder_forward.4} parent=0 // loop_header
    %s11 = sphi 0, %s15
    %p12 = scmp.ge.s32.totalorder %s11, 4
    %s21 = sphi 0, %s23
    %s24 = sphi 0, %s21
    %s25 = sphi 0, %s24
    %s41 = sphi 0, %s25
    %s45 = sphi 0, %s45
    %s47 = sphi 0, %s45
    %s48 = sphi 0, %s47
    %s62 = sphi 0, %s48
    %s66 = sphi 0, %s66
    %s68 = sphi 0, %s66
    %s69 = sphi 0, %s68
    %s83 = sphi 0, %s69
    %s87 = sphi 0, %s87
    %s89 = sphi 0, %s87
    %s90 = sphi 0, %s89
    %s104 = sphi 0, %s90
    %s108 = sphi 0, %s108
    %s110 = sphi 0, %s108
    %s111 = sphi 0, %s110
    %s125 = sphi 0, %s111
    %s131 = sphi 0, %s133
    %s134 = sphi 0, %s131
    %s135 = sphi 0, %s134
    %s151 = sphi 0, %s135
  $region4: #{encoder_forward.4} parent=0 // loop_header_branch
    %14 = sbr.rel (%p12) target = $region8
  $region5: #{encoder_forward.4} parent=0 // loop_body
    %s16 = ssub.s32 %s11, 1
    %s17 = ssub.s32 %s11, 2
    %s18 = sadd.s32 %s11, 1
    %s19 = ssub.s32 %s11, %s18
    %p20 = scmp.eq.s32.totalorder %s19, 0
    %s22 = sadd.s32 %s21, 1
    %s23 = scalar_select %p20, %s21, %s22
    %p26 = pneg %p20
    %p27 = scmp.eq.s32.totalorder %s11, 1
    %p28 = por %p26, %p27
    %p29 = scmp.ne.s32.totalorder %s21, %s24
    %p30 = scmp.eq.s32.totalorder %s11, 0
    %p31 = por %p29, %p30
    %p32 = scmp.ne.s32.totalorder %s21, %s24
    %p33 = scmp.eq.s32.totalorder %s16, 1
    %p34 = por %p32, %p33
    %p35 = scmp.ne.s32.totalorder %s24, %s25
    %p36 = scmp.eq.s32.totalorder %s16, 0
    %p37 = por %p35, %p36
    %p38 = scmp.ne.s32.totalorder %s24, %s25
    %p39 = scmp.eq.s32.totalorder %s17, 1
    %p40 = por %p38, %p39
    %p42 = scmp.ne.s32.totalorder %s25, %s41
    %p43 = scmp.eq.s32.totalorder %s17, 0
    %p44 = por %p42, %p43
    %s46 = sadd.s32 %s45, 1
    %p49 = scmp.eq.s32.totalorder %s11, 1
    %p50 = scmp.ne.s32.totalorder %s45, %s47
    %p51 = scmp.eq.s32.totalorder %s11, 0
    %p52 = por %p50, %p51
    %p53 = scmp.ne.s32.totalorder %s45, %s47
    %p54 = scmp.eq.s32.totalorder %s16, 1
    %p55 = por %p53, %p54
    %p56 = scmp.ne.s32.totalorder %s47, %s48
    %p57 = scmp.eq.s32.totalorder %s16, 0
    %p58 = por %p56, %p57
    %p59 = scmp.ne.s32.totalorder %s47, %s48
    %p60 = scmp.eq.s32.totalorder %s17, 1
    %p61 = por %p59, %p60
    %p63 = scmp.ne.s32.totalorder %s48, %s62
    %p64 = scmp.eq.s32.totalorder %s17, 0
    %p65 = por %p63, %p64
    %s67 = sadd.s32 %s66, 1
    %p70 = scmp.eq.s32.totalorder %s11, 1
    %p71 = scmp.ne.s32.totalorder %s66, %s68
    %p72 = scmp.eq.s32.totalorder %s11, 0
    %p73 = por %p71, %p72
    %p74 = scmp.ne.s32.totalorder %s66, %s68
    %p75 = scmp.eq.s32.totalorder %s16, 1
    %p76 = por %p74, %p75
    %p77 = scmp.ne.s32.totalorder %s68, %s69
    %p78 = scmp.eq.s32.totalorder %s16, 0
    %p79 = por %p77, %p78
    %p80 = scmp.ne.s32.totalorder %s68, %s69
    %p81 = scmp.eq.s32.totalorder %s17, 1
    %p82 = por %p80, %p81
    %p84 = scmp.ne.s32.totalorder %s69, %s83
    %p85 = scmp.eq.s32.totalorder %s17, 0
    %p86 = por %p84, %p85
    %s88 = sadd.s32 %s87, 1
    %p91 = scmp.eq.s32.totalorder %s11, 1
    %p92 = scmp.ne.s32.totalorder %s87, %s89
    %p93 = scmp.eq.s32.totalorder %s11, 0
    %p94 = por %p92, %p93
    %p95 = scmp.ne.s32.totalorder %s87, %s89
    %p96 = scmp.eq.s32.totalorder %s16, 1
    %p97 = por %p95, %p96
    %p98 = scmp.ne.s32.totalorder %s89, %s90
    %p99 = scmp.eq.s32.totalorder %s16, 0
    %p100 = por %p98, %p99
    %p101 = scmp.ne.s32.totalorder %s89, %s90
    %p102 = scmp.eq.s32.totalorder %s17, 1
    %p103 = por %p101, %p102
    %p105 = scmp.ne.s32.totalorder %s90, %s104
    %p106 = scmp.eq.s32.totalorder %s17, 0
    %p107 = por %p105, %p106
    %s109 = sadd.s32 %s108, 1
    %p112 = scmp.eq.s32.totalorder %s11, 1
    %p113 = scmp.ne.s32.totalorder %s108, %s110
    %p114 = scmp.eq.s32.totalorder %s11, 0
    %p115 = por %p113, %p114
    %p116 = scmp.ne.s32.totalorder %s108, %s110
    %p117 = scmp.eq.s32.totalorder %s16, 1
    %p118 = por %p116, %p117
    %p119 = scmp.ne.s32.totalorder %s110, %s111
    %p120 = scmp.eq.s32.totalorder %s16, 0
    %p121 = por %p119, %p120
    %p122 = scmp.ne.s32.totalorder %s110, %s111
    %p123 = scmp.eq.s32.totalorder %s17, 1
    %p124 = por %p122, %p123
    %p126 = scmp.ne.s32.totalorder %s111, %s125
    %p127 = scmp.eq.s32.totalorder %s17, 0
    %p128 = por %p126, %p127
    %s129 = ssub.s32 %s11, %s18
    %p130 = scmp.eq.s32.totalorder %s129, 0
    %s132 = sadd.s32 %s131, 1
    %s133 = scalar_select %p130, %s131, %s132
    %p136 = pneg %p130
    %p137 = scmp.eq.s32.totalorder %s11, 1
    %p138 = por %p136, %p137
    %p139 = scmp.ne.s32.totalorder %s131, %s134
    %p140 = scmp.eq.s32.totalorder %s11, 0
    %p141 = por %p139, %p140
    %p142 = scmp.ne.s32.totalorder %s131, %s134
    %p143 = scmp.eq.s32.totalorder %s16, 1
    %p144 = por %p142, %p143
    %p145 = scmp.ne.s32.totalorder %s134, %s135
    %p146 = scmp.eq.s32.totalorder %s16, 0
    %p147 = por %p145, %p146
    %p148 = scmp.ne.s32.totalorder %s134, %s135
    %p149 = scmp.eq.s32.totalorder %s17, 1
    %p150 = por %p148, %p149
    %p152 = scmp.ne.s32.totalorder %s135, %s151
    %p153 = scmp.eq.s32.totalorder %s17, 0
    %p154 = por %p152, %p153
    %p155 = scmp.le.s32.totalorder 1, %s11
    %p156 = scmp.lt.s32.totalorder %s11, 3
    %p157 = pnand %p155, %p156
    %p158 = pneg %p157
    // Predicated region
    $region9: #{encoder_forward.4} parent=5 // pred_check
      _
    $region10: #{encoder_forward.4} parent=5 // pred_check_branch
      %160 = sbr.rel (%p157) target = $region12
    $region11: #{encoder_forward.4} parent=5 // pred_region
      %s161 = ssub.s32 %s11, 1
      // Predicated region
      $region13: #{encoder_forward.4} parent=11 // pred_check
        %p162 = pneg %p58
      $region14: #{encoder_forward.4} parent=11 // pred_check_branch
        %164 = sbr.rel (%p162) target = $region16
      $region15: #{encoder_forward.4} parent=11 // pred_region
        _
      $region16: #{encoder_forward.4} parent=11 // pred_fallthru
        _
      // Predicated region
      $region17: #{encoder_forward.4} parent=11 // pred_check
        %p165 = pneg %p79
      $region18: #{encoder_forward.4} parent=11 // pred_check_branch
        %167 = sbr.rel (%p165) target = $region20
      $region19: #{encoder_forward.4} parent=11 // pred_region
        _
      $region20: #{encoder_forward.4} parent=11 // pred_fallthru
        _
      // Predicated region
      $region21: #{encoder_forward.4} parent=11 // pred_check
        %p168 = pneg %p100
      $region22: #{encoder_forward.4} parent=11 // pred_check_branch
        %170 = sbr.rel (%p168) target = $region24
      $region23: #{encoder_forward.4} parent=11 // pred_region
        _
      $region24: #{encoder_forward.4} parent=11 // pred_fallthru
        _
      // Predicated region
      $region25: #{encoder_forward.4} parent=11 // pred_check
        %p171 = pneg %p121
      $region26: #{encoder_forward.4} parent=11 // pred_check_branch
        %173 = sbr.rel (%p171) target = $region28
      $region27: #{encoder_forward.4} parent=11 // pred_region
        _
      $region28: #{encoder_forward.4} parent=11 // pred_fallthru
        _
    $region12: #{encoder_forward.4} parent=5 // pred_fallthru
      _
    %p174 = scmp.lt.s32.totalorder %s11, 2
    // Predicated region
    $region29: #{encoder_forward.4} parent=5 // pred_check
      %p175 = pneg %p174
    $region30: #{encoder_forward.4} parent=5 // pred_check_branch
      %177 = sbr.rel (%p175) target = $region32
    $region31: #{encoder_forward.4} parent=5 // pred_region
      // Predicated region
      $region33: #{encoder_forward.4} parent=31 // pred_check
        %p178 = pneg %p31
      $region34: #{encoder_forward.4} parent=31 // pred_check_branch
        %180 = sbr.rel (%p178) target = $region36
      $region35: #{encoder_forward.4} parent=31 // pred_region
        %p181 = scmp.lt.s32.totalorder %s11, 1
        %s182 = scalar_select %p181, %s11, 1
        %s183 = smul.addr %s182, 4
        %s184 = smul.addr %s183, 4
        %s185 = scalar_lea.vmem %s0, %s184
      $region36: #{encoder_forward.4} parent=31 // pred_fallthru
        _
    $region32: #{encoder_forward.4} parent=5 // pred_fallthru
      _
    %p186 = scmp.le.s32.totalorder 1, %s11
    %p187 = scmp.lt.s32.totalorder %s11, 3
    %p188 = pnand %p186, %p187
    %p189 = pneg %p188
    // Predicated region
    $region37: #{encoder_forward.4} parent=5 // pred_check
      _
    $region38: #{encoder_forward.4} parent=5 // pred_check_branch
      %191 = sbr.rel (%p188) target = $region40
    $region39: #{encoder_forward.4} parent=5 // pred_region
      %s192 = ssub.s32 %s11, 1
      %p193 = scmp.lt.s32.totalorder %s16, 1
      %s194 = scalar_select %p193, %s16, 1
      %s195 = smul.addr %s194, 4
      %s196 = smul.addr %s195, 4
      %s197 = scalar_lea.vmem %s0, %s196
      %p198 = pneg %p37
      %p199 = pneg %p34
      %p200 = pneg %p58
      %p201 = pneg %p55
      %p202 = pneg %p79
      %p203 = pneg %p76
      %p204 = pneg %p100
      %p205 = pneg %p97
      %p206 = pneg %p121
      %p207 = pneg %p118
      %p208 = pneg %p147
      %p209 = pneg %p144
      %p210 = scmp.lt.s32.totalorder %s16, 1
      %s211 = scalar_select %p210, %s16, 1
      %s212 = smul.addr %s211, 3
      %s213 = smul.addr %s212, 4
      %s214 = scalar_lea.vmem %s5, %s213
      %p215 = scmp.lt.s32.totalorder %s16, 1
      %s216 = scalar_select %p215, %s16, 1
      %s217 = smul.addr %s216, 4
      %s218 = smul.addr %s217, 4
      %s219 = scalar_lea.vmem %s0, %s218
      %p220 = scmp.lt.s32.totalorder %s16, 1
      %s221 = scalar_select %p220, %s16, 1
      %s222 = smul.addr %s221, 3
      %s223 = smul.addr %s222, 4
      %s224 = scalar_lea.vmem %s5, %s223
      %v226 = vld [vmem:[%s219] sm:$0xf]
      %v227 = vld [vmem:[%s219 + $0x4] sm:$0xf]
      %v228 = vld [vmem:[%s219 + $0x8] sm:$0xf]
      %v229 = vld [vmem:[%s219 + $0xc] sm:$0x7]
      %v230 = vunpack.c.l.bf16 %v226
      %v231 = vunpack.c.l.bf16 %v227
      %v232 = vunpack.c.l.bf16 %v228
      %v233 = vunpack.c.l.bf16 %v229
      %v234 = vpack.c.bf16 %v231, %v230
      %v235 = vpack.c.bf16 %v232, %v232
      %v236 = vld [vmem:[%s1] sm:$0xf]
      %s237 = scalar_lea.vmem %s1, 4
      %v238 = vld [vmem:[%s237] sm:$0xf]
      %241 = vrot.lane.b32.xlu0 %v234, 120
      %v242 = vpop.permute.xlu0 %241
      %243 = vrot.lane.b32.xlu0 %v235, 120
      %v244 = vpop.permute.xlu0 %243
      %vm245 = vcmask 64512
      %v247 = vsel %vm245, %v242, 0
      %v250 = vsel %vm245, %v244, 0
      %vm252 = vcmask 1043456
      %v254 = vsel %vm252, %v238, 0
      %256 = vmatprep.subr.bf16.mxu0 0
      %257 = vmatpush1.bf16.msra.mxu0 0
      %258 = vmatprep.subr.bf16.mxu0 0
      %259 = vmatpush1.bf16.msra.mxu0 0
      %260 = vmatprep.subr.bf16.mxu0 0
      %261 = vmatpush1.bf16.msra.mxu0 0
      %262 = vmatprep.subr.bf16.mxu0 0
      %263 = vmatpush1.bf16.msra.mxu0 0
      %264 = vmatprep.subr.bf16.mxu0 0
      %265 = vmatpush1.bf16.msra.mxu0 0
      %266 = vmatprep.subr.bf16.mxu0 0
      %267 = vmatpush1.bf16.msra.mxu0 0
      %268 = vmatprep.subr.bf16.mxu0 0
      %269 = vmatpush1.bf16.msra.mxu0 0
      %270 = vmatprep.subr.bf16.mxu0 0
      %271 = vmatpush1.bf16.msra.mxu0 %v254
      %272 = vmatprep.subr.bf16.mxu0 0
      %273 = vmatpush2.bf16.msra.mxu0 0
      %274 = vmatprep.subr.bf16.mxu0 0
      %275 = vmatpush2.bf16.msra.mxu0 0
      %276 = vmatprep.subr.bf16.mxu0 0
      %277 = vmatpush2.bf16.msra.mxu0 0
      %278 = vmatprep.subr.bf16.mxu0 0
      %279 = vmatpush2.bf16.msra.mxu0 0
      %280 = vmatprep.subr.bf16.mxu0 0
      %281 = vmatpush2.bf16.msra.mxu0 0
      %282 = vmatprep.subr.bf16.mxu0 0
      %283 = vmatpush2.bf16.msra.mxu0 0
      %284 = vmatprep.subr.bf16.mxu0 0
      %285 = vmatpush2.bf16.msra.mxu0 0
      %286 = vmatprep.subr.bf16.mxu0 0
      %287 = vmatpush2.bf16.msra.mxu0 0
      %288 = vmatprep.mubr.bf16.mxu0 0
      %289 = vmatmul.mubr.bf16.gmra.mxu0 %v247
      %v290 = vpop.f32.mrf.mxu0
      %v291 = vadd.f32 0.0, %v290
      %v292 = vpop.f32.mrf.mxu0
      %v293 = vpop.f32.mrf.mxu0
      %v294 = vadd.f32 0.0, %v293
      %v295 = vpop.f32.mrf.mxu0
      %296 = vmatprep.mubr.bf16.mxu0 0
      %297 = vmatmul.mubr.bf16.gmra.mxu0 %v250
      %v298 = vpop.f32.mrf.mxu0
      %v299 = vadd.f32 0.0, %v298
      %v300 = vpop.f32.mrf.mxu0
      %v301 = vpop.f32.mrf.mxu0
      %v302 = vpop.f32.mrf.mxu0
      %303 = vdwg.mxu0
      %v305 = vsel %vm245, %v234, 0
      %v308 = vsel %vm245, %v235, 0
      %v311 = vsel %vm252, %v236, 0
      %313 = vmatprep.subr.bf16.mxu0 0
      %314 = vmatpush1.bf16.msra.mxu0 0
      %315 = vmatprep.subr.bf16.mxu0 0
      %316 = vmatpush1.bf16.msra.mxu0 0
      %317 = vmatprep.subr.bf16.mxu0 0
      %318 = vmatpush1.bf16.msra.mxu0 0
      %319 = vmatprep.subr.bf16.mxu0 0
      %320 = vmatpush1.bf16.msra.mxu0 0
      %321 = vmatprep.subr.bf16.mxu0 0
      %322 = vmatpush1.bf16.msra.mxu0 0
      %323 = vmatprep.subr.bf16.mxu0 0
      %324 = vmatpush1.bf16.msra.mxu0 0
      %325 = vmatprep.subr.bf16.mxu0 0
      %326 = vmatpush1.bf16.msra.mxu0 0
      %327 = vmatprep.subr.bf16.mxu0 0
      %328 = vmatpush1.bf16.msra.mxu0 %v311
      %329 = vmatprep.subr.bf16.mxu0 0
      %330 = vmatpush2.bf16.msra.mxu0 0
      %331 = vmatprep.subr.bf16.mxu0 0
      %332 = vmatpush2.bf16.msra.mxu0 0
      %333 = vmatprep.subr.bf16.mxu0 0
      %334 = vmatpush2.bf16.msra.mxu0 0
      %335 = vmatprep.subr.bf16.mxu0 0
      %336 = vmatpush2.bf16.msra.mxu0 0
      %337 = vmatprep.subr.bf16.mxu0 0
      %338 = vmatpush2.bf16.msra.mxu0 0
      %339 = vmatprep.subr.bf16.mxu0 0
      %340 = vmatpush2.bf16.msra.mxu0 0
      %341 = vmatprep.subr.bf16.mxu0 0
      %342 = vmatpush2.bf16.msra.mxu0 0
      %343 = vmatprep.subr.bf16.mxu0 0
      %344 = vmatpush2.bf16.msra.mxu0 0
      %345 = vmatprep.mubr.bf16.mxu0 0
      %346 = vmatmul.mubr.bf16.gmra.mxu0 %v305
      %v347 = vpop.f32.mrf.mxu0
      %v348 = vadd.f32 %v291, %v347
      %v349 = vpop.f32.mrf.mxu0
      %v350 = vpop.f32.mrf.mxu0
      %v351 = vadd.f32 %v294, %v350
      %v352 = vpop.f32.mrf.mxu0
      %353 = vmatprep.mubr.bf16.mxu0 0
      %354 = vmatmul.mubr.bf16.gmra.mxu0 %v308
      %v355 = vpop.f32.mrf.mxu0
      %v356 = vadd.f32 %v299, %v355
      %v357 = vpop.f32.mrf.mxu0
      %v358 = vpop.f32.mrf.mxu0
      %v359 = vpop.f32.mrf.mxu0
      %360 = vdwg.mxu0
      %s361 = scalar_lea.vmem %s1, 8
      %v362 = vld [vmem:[%s361] sm:$0xf]
      %vm363 = vsmask.f32 7424
      %v364 = vshrl.u32 %v234, 16
      %v366 = vshll.u32 %v234, 16
      %v368 = vrot.slane %v366, 1
      %v369 = vor.u32 %v364, %v368
      %v370 = vshll.u32 %v235, 16
      %v372 = vrot.slane %v370, 1
      %v373 = vsel %vm363, %v369, %v372
      %v374 = vshrl.u32 %v235, 16
      %v376 = vor.u32 %v374, %v372
      %v378 = vsel %vm245, %v373, 0
      %v381 = vsel %vm245, %v376, 0
      %v384 = vsel %vm252, %v362, 0
      %386 = vmatprep.subr.bf16.mxu0 0
      %387 = vmatpush1.bf16.msra.mxu0 0
      %388 = vmatprep.subr.bf16.mxu0 0
      %389 = vmatpush1.bf16.msra.mxu0 0
      %390 = vmatprep.subr.bf16.mxu0 0
      %391 = vmatpush1.bf16.msra.mxu0 0
      %392 = vmatprep.subr.bf16.mxu0 0
      %393 = vmatpush1.bf16.msra.mxu0 0
      %394 = vmatprep.subr.bf16.mxu0 0
      %395 = vmatpush1.bf16.msra.mxu0 0
      %396 = vmatprep.subr.bf16.mxu0 0
      %397 = vmatpush1.bf16.msra.mxu0 0
      %398 = vmatprep.subr.bf16.mxu0 0
      %399 = vmatpush1.bf16.msra.mxu0 0
      %400 = vmatprep.subr.bf16.mxu0 0
      %401 = vmatpush1.bf16.msra.mxu0 %v384
      %402 = vmatprep.subr.bf16.mxu0 0
      %403 = vmatpush2.bf16.msra.mxu0 0
      %404 = vmatprep.subr.bf16.mxu0 0
      %405 = vmatpush2.bf16.msra.mxu0 0
      %406 = vmatprep.subr.bf16.mxu0 0
      %407 = vmatpush2.bf16.msra.mxu0 0
      %408 = vmatprep.subr.bf16.mxu0 0
      %409 = vmatpush2.bf16.msra.mxu0 0
      %410 = vmatprep.subr.bf16.mxu0 0
      %411 = vmatpush2.bf16.msra.mxu0 0
      %412 = vmatprep.subr.bf16.mxu0 0
      %413 = vmatpush2.bf16.msra.mxu0 0
      %414 = vmatprep.subr.bf16.mxu0 0
      %415 = vmatpush2.bf16.msra.mxu0 0
      %416 = vmatprep.subr.bf16.mxu0 0
      %417 = vmatpush2.bf16.msra.mxu0 0
      %418 = vmatprep.mubr.bf16.mxu0 0
      %419 = vmatmul.mubr.bf16.gmra.mxu0 %v378
      %v420 = vpop.f32.mrf.mxu0
      %v421 = vadd.f32 0.0, %v420
      %v422 = vpop.f32.mrf.mxu0
      %v423 = vpop.f32.mrf.mxu0
      %v424 = vadd.f32 0.0, %v423
      %v425 = vpop.f32.mrf.mxu0
      %426 = vmatprep.mubr.bf16.mxu0 0
      %427 = vmatmul.mubr.bf16.gmra.mxu0 %v381
      %v428 = vpop.f32.mrf.mxu0
      %v429 = vadd.f32 0.0, %v428
      %v430 = vpop.f32.mrf.mxu0
      %v431 = vpop.f32.mrf.mxu0
      %v432 = vpop.f32.mrf.mxu0
      %433 = vdwg.mxu0
      %v434 = vadd.f32 %v348, %v421
      %v435 = vadd.f32 %v351, %v424
      %v436 = vadd.f32 %v356, %v429
      %s437 = scalar_lea.vmem %s1, 12
      %v438 = vld [vmem:[%s437] sm:$0xf]
      %439 = vrot.lane.b32.xlu0 %v234, 112
      %v440 = vpop.permute.xlu0 %439
      %441 = vrot.lane.b32.xlu0 %v235, 112
      %v442 = vpop.permute.xlu0 %441
      %v444 = vsel %vm245, %v440, 0
      %v447 = vsel %vm245, %v442, 0
      %v450 = vsel %vm252, %v438, 0
      %452 = vmatprep.subr.bf16.mxu0 0
      %453 = vmatpush1.bf16.msra.mxu0 0
      %454 = vmatprep.subr.bf16.mxu0 0
      %455 = vmatpush1.bf16.msra.mxu0 0
      %456 = vmatprep.subr.bf16.mxu0 0
      %457 = vmatpush1.bf16.msra.mxu0 0
      %458 = vmatprep.subr.bf16.mxu0 0
      %459 = vmatpush1.bf16.msra.mxu0 0
      %460 = vmatprep.subr.bf16.mxu0 0
      %461 = vmatpush1.bf16.msra.mxu0 0
      %462 = vmatprep.subr.bf16.mxu0 0
      %463 = vmatpush1.bf16.msra.mxu0 0
      %464 = vmatprep.subr.bf16.mxu0 0
      %465 = vmatpush1.bf16.msra.mxu0 0
      %466 = vmatprep.subr.bf16.mxu0 0
      %467 = vmatpush1.bf16.msra.mxu0 %v450
      %468 = vmatprep.subr.bf16.mxu0 0
      %469 = vmatpush2.bf16.msra.mxu0 0
      %470 = vmatprep.subr.bf16.mxu0 0
      %471 = vmatpush2.bf16.msra.mxu0 0
      %472 = vmatprep.subr.bf16.mxu0 0
      %473 = vmatpush2.bf16.msra.mxu0 0
      %474 = vmatprep.subr.bf16.mxu0 0
      %475 = vmatpush2.bf16.msra.mxu0 0
      %476 = vmatprep.subr.bf16.mxu0 0
      %477 = vmatpush2.bf16.msra.mxu0 0
      %478 = vmatprep.subr.bf16.mxu0 0
      %479 = vmatpush2.bf16.msra.mxu0 0
      %480 = vmatprep.subr.bf16.mxu0 0
      %481 = vmatpush2.bf16.msra.mxu0 0
      %482 = vmatprep.subr.bf16.mxu0 0
      %483 = vmatpush2.bf16.msra.mxu0 0
      %484 = vmatprep.mubr.bf16.mxu0 0
      %485 = vmatmul.mubr.bf16.gmra.mxu0 %v444
      %v486 = vpop.f32.mrf.mxu0
      %v487 = vadd.f32 0.0, %v486
      %v488 = vpop.f32.mrf.mxu0
      %v489 = vpop.f32.mrf.mxu0
      %v490 = vadd.f32 0.0, %v489
      %v491 = vpop.f32.mrf.mxu0
      %492 = vmatprep.mubr.bf16.mxu0 0
      %493 = vmatmul.mubr.bf16.gmra.mxu0 %v447
      %v494 = vpop.f32.mrf.mxu0
      %v495 = vadd.f32 0.0, %v494
      %v496 = vpop.f32.mrf.mxu0
      %v497 = vpop.f32.mrf.mxu0
      %v498 = vpop.f32.mrf.mxu0
      %499 = vdwg.mxu0
      %v500 = vadd.f32 %v434, %v487
      %v501 = vadd.f32 %v435, %v490
      %v502 = vadd.f32 %v436, %v495
      %s503 = scalar_lea.vmem %s1, 16
      %v504 = vld [vmem:[%s503] sm:$0xf]
      %505 = vrot.lane.b32.xlu0 %v234, 104
      %v506 = vpop.permute.xlu0 %505
      %507 = vrot.lane.b32.xlu0 %v235, 104
      %v508 = vpop.permute.xlu0 %507
      %v510 = vsel %vm245, %v506, 0
      %v513 = vsel %vm245, %v508, 0
      %v516 = vsel %vm252, %v504, 0
      %518 = vmatprep.subr.bf16.mxu0 0
      %519 = vmatpush1.bf16.msra.mxu0 0
      %520 = vmatprep.subr.bf16.mxu0 0
      %521 = vmatpush1.bf16.msra.mxu0 0
      %522 = vmatprep.subr.bf16.mxu0 0
      %523 = vmatpush1.bf16.msra.mxu0 0
      %524 = vmatprep.subr.bf16.mxu0 0
      %525 = vmatpush1.bf16.msra.mxu0 0
      %526 = vmatprep.subr.bf16.mxu0 0
      %527 = vmatpush1.bf16.msra.mxu0 0
      %528 = vmatprep.subr.bf16.mxu0 0
      %529 = vmatpush1.bf16.msra.mxu0 0
      %530 = vmatprep.subr.bf16.mxu0 0
      %531 = vmatpush1.bf16.msra.mxu0 0
      %532 = vmatprep.subr.bf16.mxu0 0
      %533 = vmatpush1.bf16.msra.mxu0 %v516
      %534 = vmatprep.subr.bf16.mxu0 0
      %535 = vmatpush2.bf16.msra.mxu0 0
      %536 = vmatprep.subr.bf16.mxu0 0
      %537 = vmatpush2.bf16.msra.mxu0 0
      %538 = vmatprep.subr.bf16.mxu0 0
      %539 = vmatpush2.bf16.msra.mxu0 0
      %540 = vmatprep.subr.bf16.mxu0 0
      %541 = vmatpush2.bf16.msra.mxu0 0
      %542 = vmatprep.subr.bf16.mxu0 0
      %543 = vmatpush2.bf16.msra.mxu0 0
      %544 = vmatprep.subr.bf16.mxu0 0
      %545 = vmatpush2.bf16.msra.mxu0 0
      %546 = vmatprep.subr.bf16.mxu0 0
      %547 = vmatpush2.bf16.msra.mxu0 0
      %548 = vmatprep.subr.bf16.mxu0 0
      %549 = vmatpush2.bf16.msra.mxu0 0
      %550 = vmatprep.mubr.bf16.mxu0 0
      %551 = vmatmul.mubr.bf16.gmra.mxu0 %v510
      %v552 = vpop.f32.mrf.mxu0
      %v553 = vadd.f32 0.0, %v552
      %v554 = vpop.f32.mrf.mxu0
      %v555 = vpop.f32.mrf.mxu0
      %v556 = vadd.f32 0.0, %v555
      %v557 = vpop.f32.mrf.mxu0
      %558 = vmatprep.mubr.bf16.mxu0 0
      %559 = vmatmul.mubr.bf16.gmra.mxu0 %v513
      %v560 = vpop.f32.mrf.mxu0
      %v561 = vadd.f32 0.0, %v560
      %v562 = vpop.f32.mrf.mxu0
      %v563 = vpop.f32.mrf.mxu0
      %v564 = vpop.f32.mrf.mxu0
      %565 = vdwg.mxu0
      %v566 = vadd.f32 %v500, %v553
      %v567 = vadd.f32 %v501, %v556
      %v568 = vadd.f32 %v502, %v561
      %s569 = scalar_lea.vmem %s1, 20
      %v570 = vld [vmem:[%s569] sm:$0xf]
      %571 = vrot.lane.b32.xlu0 %v373, 112
      %v572 = vpop.permute.xlu0 %571
      %573 = vrot.lane.b32.xlu0 %v376, 112
      %v574 = vpop.permute.xlu0 %573
      %v576 = vsel %vm245, %v572, 0
      %v579 = vsel %vm245, %v574, 0
      %v582 = vsel %vm252, %v570, 0
      %584 = vmatprep.subr.bf16.mxu0 0
      %585 = vmatpush1.bf16.msra.mxu0 0
      %586 = vmatprep.subr.bf16.mxu0 0
      %587 = vmatpush1.bf16.msra.mxu0 0
      %588 = vmatprep.subr.bf16.mxu0 0
      %589 = vmatpush1.bf16.msra.mxu0 0
      %590 = vmatprep.subr.bf16.mxu0 0
      %591 = vmatpush1.bf16.msra.mxu0 0
      %592 = vmatprep.subr.bf16.mxu0 0
      %593 = vmatpush1.bf16.msra.mxu0 0
      %594 = vmatprep.subr.bf16.mxu0 0
      %595 = vmatpush1.bf16.msra.mxu0 0
      %596 = vmatprep.subr.bf16.mxu0 0
      %597 = vmatpush1.bf16.msra.mxu0 0
      %598 = vmatprep.subr.bf16.mxu0 0
      %599 = vmatpush1.bf16.msra.mxu0 %v582
      %600 = vmatprep.subr.bf16.mxu0 0
      %601 = vmatpush2.bf16.msra.mxu0 0
      %602 = vmatprep.subr.bf16.mxu0 0
      %603 = vmatpush2.bf16.msra.mxu0 0
      %604 = vmatprep.subr.bf16.mxu0 0
      %605 = vmatpush2.bf16.msra.mxu0 0
      %606 = vmatprep.subr.bf16.mxu0 0
      %607 = vmatpush2.bf16.msra.mxu0 0
      %608 = vmatprep.subr.bf16.mxu0 0
      %609 = vmatpush2.bf16.msra.mxu0 0
      %610 = vmatprep.subr.bf16.mxu0 0
      %611 = vmatpush2.bf16.msra.mxu0 0
      %612 = vmatprep.subr.bf16.mxu0 0
      %613 = vmatpush2.bf16.msra.mxu0 0
      %614 = vmatprep.subr.bf16.mxu0 0
      %615 = vmatpush2.bf16.msra.mxu0 0
      %616 = vmatprep.mubr.bf16.mxu0 0
      %617 = vmatmul.mubr.bf16.gmra.mxu0 %v576
      %v618 = vpop.f32.mrf.mxu0
      %v619 = vadd.f32 0.0, %v618
      %v620 = vpop.f32.mrf.mxu0
      %v621 = vpop.f32.mrf.mxu0
      %v622 = vadd.f32 0.0, %v621
      %v623 = vpop.f32.mrf.mxu0
      %624 = vmatprep.mubr.bf16.mxu0 0
      %625 = vmatmul.mubr.bf16.gmra.mxu0 %v579
      %v626 = vpop.f32.mrf.mxu0
      %v627 = vadd.f32 0.0, %v626
      %v628 = vpop.f32.mrf.mxu0
      %v629 = vpop.f32.mrf.mxu0
      %v630 = vpop.f32.mrf.mxu0
      %631 = vdwg.mxu0
      %v632 = vadd.f32 %v566, %v619
      %v633 = vadd.f32 %v567, %v622
      %v634 = vadd.f32 %v568, %v627
      %v635 = vpack.c.bf16 %v233, %v232
      %s636 = scalar_lea.vmem %s1, 24
      %v637 = vld [vmem:[%s636] sm:$0xf]
      %vm638 = vsmask.f32 5376
      %v639 = vrot.slane %v364, 2
      %v640 = vrot.slane %v366, 3
      %v641 = vor.u32 %v639, %v640
      %v643 = vshrl.u32 %v635, 16
      %v645 = vrot.slane %v643, 2
      %v646 = vshll.u32 %v635, 16
      %v648 = vrot.slane %v646, 3
      %v649 = vor.u32 %v645, %v648
      %v650 = vsel %vm638, %v641, %v649
      %v652 = vsel %vm245, %v650, 0
      %v655 = vsel %vm245, %v649, 0
      %v658 = vsel %vm252, %v637, 0
      %660 = vmatprep.subr.bf16.mxu0 0
      %661 = vmatpush1.bf16.msra.mxu0 0
      %662 = vmatprep.subr.bf16.mxu0 0
      %663 = vmatpush1.bf16.msra.mxu0 0
      %664 = vmatprep.subr.bf16.mxu0 0
      %665 = vmatpush1.bf16.msra.mxu0 0
      %666 = vmatprep.subr.bf16.mxu0 0
      %667 = vmatpush1.bf16.msra.mxu0 0
      %668 = vmatprep.subr.bf16.mxu0 0
      %669 = vmatpush1.bf16.msra.mxu0 0
      %670 = vmatprep.subr.bf16.mxu0 0
      %671 = vmatpush1.bf16.msra.mxu0 0
      %672 = vmatprep.subr.bf16.mxu0 0
      %673 = vmatpush1.bf16.msra.mxu0 0
      %674 = vmatprep.subr.bf16.mxu0 0
      %675 = vmatpush1.bf16.msra.mxu0 %v658
      %676 = vmatprep.subr.bf16.mxu0 0
      %677 = vmatpush2.bf16.msra.mxu0 0
      %678 = vmatprep.subr.bf16.mxu0 0
      %679 = vmatpush2.bf16.msra.mxu0 0
      %680 = vmatprep.subr.bf16.mxu0 0
      %681 = vmatpush2.bf16.msra.mxu0 0
      %682 = vmatprep.subr.bf16.mxu0 0
      %683 = vmatpush2.bf16.msra.mxu0 0
      %684 = vmatprep.subr.bf16.mxu0 0
      %685 = vmatpush2.bf16.msra.mxu0 0
      %686 = vmatprep.subr.bf16.mxu0 0
      %687 = vmatpush2.bf16.msra.mxu0 0
      %688 = vmatprep.subr.bf16.mxu0 0
      %689 = vmatpush2.bf16.msra.mxu0 0
      %690 = vmatprep.subr.bf16.mxu0 0
      %691 = vmatpush2.bf16.msra.mxu0 0
      %692 = vmatprep.mubr.bf16.mxu0 0
      %693 = vmatmul.mubr.bf16.gmra.mxu0 %v652
      %v694 = vpop.f32.mrf.mxu0
      %v695 = vadd.f32 0.0, %v694
      %v696 = vpop.f32.mrf.mxu0
      %v697 = vpop.f32.mrf.mxu0
      %v698 = vadd.f32 0.0, %v697
      %v699 = vpop.f32.mrf.mxu0
      %700 = vmatprep.mubr.bf16.mxu0 0
      %701 = vmatmul.mubr.bf16.gmra.mxu0 %v655
      %v702 = vpop.f32.mrf.mxu0
      %v703 = vadd.f32 0.0, %v702
      %v704 = vpop.f32.mrf.mxu0
      %v705 = vpop.f32.mrf.mxu0
      %v706 = vpop.f32.mrf.mxu0
      %707 = vdwg.mxu0
      %v708 = vadd.f32 %v632, %v695
      %v709 = vadd.f32 %v633, %v698
      %v710 = vadd.f32 %v634, %v703
      %s711 = scalar_lea.vmem %s1, 28
      %v712 = vld [vmem:[%s711] sm:$0xf]
      %713 = vrot.lane.b32.xlu0 %v650, 120
      %v714 = vpop.permute.xlu0 %713
      %715 = vrot.lane.b32.xlu0 %v649, 120
      %v716 = vpop.permute.xlu0 %715
      %v718 = vsel %vm245, %v714, 0
      %v721 = vsel %vm245, %v716, 0
      %v724 = vsel %vm252, %v712, 0
      %726 = vmatprep.subr.bf16.mxu0 0
      %727 = vmatpush1.bf16.msra.mxu0 0
      %728 = vmatprep.subr.bf16.mxu0 0
      %729 = vmatpush1.bf16.msra.mxu0 0
      %730 = vmatprep.subr.bf16.mxu0 0
      %731 = vmatpush1.bf16.msra.mxu0 0
      %732 = vmatprep.subr.bf16.mxu0 0
      %733 = vmatpush1.bf16.msra.mxu0 0
      %734 = vmatprep.subr.bf16.mxu0 0
      %735 = vmatpush1.bf16.msra.mxu0 0
      %736 = vmatprep.subr.bf16.mxu0 0
      %737 = vmatpush1.bf16.msra.mxu0 0
      %738 = vmatprep.subr.bf16.mxu0 0
      %739 = vmatpush1.bf16.msra.mxu0 0
      %740 = vmatprep.subr.bf16.mxu0 0
      %741 = vmatpush1.bf16.msra.mxu0 %v724
      %742 = vmatprep.subr.bf16.mxu0 0
      %743 = vmatpush2.bf16.msra.mxu0 0
      %744 = vmatprep.subr.bf16.mxu0 0
      %745 = vmatpush2.bf16.msra.mxu0 0
      %746 = vmatprep.subr.bf16.mxu0 0
      %747 = vmatpush2.bf16.msra.mxu0 0
      %748 = vmatprep.subr.bf16.mxu0 0
      %749 = vmatpush2.bf16.msra.mxu0 0
      %750 = vmatprep.subr.bf16.mxu0 0
      %751 = vmatpush2.bf16.msra.mxu0 0
      %752 = vmatprep.subr.bf16.mxu0 0
      %753 = vmatpush2.bf16.msra.mxu0 0
      %754 = vmatprep.subr.bf16.mxu0 0
      %755 = vmatpush2.bf16.msra.mxu0 0
      %756 = vmatprep.subr.bf16.mxu0 0
      %757 = vmatpush2.bf16.msra.mxu0 0
      %758 = vmatprep.mubr.bf16.mxu0 0
      %759 = vmatmul.mubr.bf16.gmra.mxu0 %v718
      %v760 = vpop.f32.mrf.mxu0
      %v761 = vadd.f32 0.0, %v760
      %v762 = vpop.f32.mrf.mxu0
      %v763 = vpop.f32.mrf.mxu0
      %v764 = vadd.f32 0.0, %v763
      %v765 = vpop.f32.mrf.mxu0
      %766 = vmatprep.mubr.bf16.mxu0 0
      %767 = vmatmul.mubr.bf16.gmra.mxu0 %v721
      %v768 = vpop.f32.mrf.mxu0
      %v769 = vadd.f32 0.0, %v768
      %v770 = vpop.f32.mrf.mxu0
      %v771 = vpop.f32.mrf.mxu0
      %v772 = vpop.f32.mrf.mxu0
      %773 = vdwg.mxu0
      %v774 = vadd.f32 %v708, %v761
      %v775 = vadd.f32 %v709, %v764
      %v776 = vadd.f32 %v710, %v769
      %s777 = scalar_lea.vmem %s1, 32
      %v778 = vld [vmem:[%s777] sm:$0xf]
      %vm780 = vcmask 1044480
      %v781 = vrot.slane %v234, 3
      %v782 = vrot.slane %v635, 3
      %v783 = vsel %vm780, %v781, %v782
      %v785 = vsel %vm245, %v783, 0
      %v788 = vsel %vm245, %v782, 0
      %v791 = vsel %vm252, %v778, 0
      %793 = vmatprep.subr.bf16.mxu0 0
      %794 = vmatpush1.bf16.msra.mxu0 0
      %795 = vmatprep.subr.bf16.mxu0 0
      %796 = vmatpush1.bf16.msra.mxu0 0
      %797 = vmatprep.subr.bf16.mxu0 0
      %798 = vmatpush1.bf16.msra.mxu0 0
      %799 = vmatprep.subr.bf16.mxu0 0
      %800 = vmatpush1.bf16.msra.mxu0 0
      %801 = vmatprep.subr.bf16.mxu0 0
      %802 = vmatpush1.bf16.msra.mxu0 0
      %803 = vmatprep.subr.bf16.mxu0 0
      %804 = vmatpush1.bf16.msra.mxu0 0
      %805 = vmatprep.subr.bf16.mxu0 0
      %806 = vmatpush1.bf16.msra.mxu0 0
      %807 = vmatprep.subr.bf16.mxu0 0
      %808 = vmatpush1.bf16.msra.mxu0 %v791
      %809 = vmatprep.subr.bf16.mxu0 0
      %810 = vmatpush2.bf16.msra.mxu0 0
      %811 = vmatprep.subr.bf16.mxu0 0
      %812 = vmatpush2.bf16.msra.mxu0 0
      %813 = vmatprep.subr.bf16.mxu0 0
      %814 = vmatpush2.bf16.msra.mxu0 0
      %815 = vmatprep.subr.bf16.mxu0 0
      %816 = vmatpush2.bf16.msra.mxu0 0
      %817 = vmatprep.subr.bf16.mxu0 0
      %818 = vmatpush2.bf16.msra.mxu0 0
      %819 = vmatprep.subr.bf16.mxu0 0
      %820 = vmatpush2.bf16.msra.mxu0 0
      %821 = vmatprep.subr.bf16.mxu0 0
      %822 = vmatpush2.bf16.msra.mxu0 0
      %823 = vmatprep.subr.bf16.mxu0 0
      %824 = vmatpush2.bf16.msra.mxu0 0
      %825 = vmatprep.mubr.bf16.mxu0 0
      %826 = vmatmul.mubr.bf16.gmra.mxu0 %v785
      %v827 = vpop.f32.mrf.mxu0
      %v828 = vadd.f32 0.0, %v827
      %v829 = vpop.f32.mrf.mxu0
      %v830 = vpop.f32.mrf.mxu0
      %v831 = vadd.f32 0.0, %v830
      %v832 = vpop.f32.mrf.mxu0
      %833 = vmatprep.mubr.bf16.mxu0 0
      %834 = vmatmul.mubr.bf16.gmra.mxu0 %v788
      %v835 = vpop.f32.mrf.mxu0
      %v836 = vadd.f32 0.0, %v835
      %v837 = vpop.f32.mrf.mxu0
      %v838 = vpop.f32.mrf.mxu0
      %v839 = vpop.f32.mrf.mxu0
      %840 = vdwg.mxu0
      %v841 = vadd.f32 %v774, %v828
      %v842 = vadd.f32 %v775, %v831
      %v843 = vadd.f32 %v776, %v836
      %v844 = vld [vmem:[%s2] sm:$0x1]
      %v846 = vlaneseq
      %v847 = vshrl.u32 %v846, 7
      %v848 = vsub.s32 0, %v847
      %v849 = vrot.slane %v844, %v848
      %v851 = vadd.f32 %v841, %v849
      %v852 = vadd.f32 %v842, %v849
      %v853 = vadd.f32 %v843, %v849
      %v854 = vmax.f32 %v851, 0.0
      %v855 = vmax.f32 %v852, 0.0
      %v856 = vmax.f32 %v853, 0.0
      %v857 = vld [vmem:[%s3] sm:$0x1]
      %v859 = vlaneseq
      %v860 = vshrl.u32 %v859, 7
      %v861 = vsub.s32 0, %v860
      %v862 = vrot.slane %v857, %v861
      %v864 = vmul.f32 %v854, %v862
      %v865 = vmul.f32 %v855, %v862
      %v866 = vmul.f32 %v856, %v862
      %v867 = vld [vmem:[%s4] sm:$0x1]
      %v869 = vlaneseq
      %v870 = vshrl.u32 %v869, 7
      %v871 = vsub.s32 0, %v870
      %v872 = vrot.slane %v867, %v871
      %v874 = vadd.f32 %v864, %v872
      %v875 = vadd.f32 %v865, %v872
      %v876 = vadd.f32 %v866, %v872
      %v877 = vpack.c.bf16 %v875, %v874
      %v878 = vpack.c.bf16 %v876, %v876
      %v881 = vunpack.c.l.b16 %v877
      %v882 = vunpack.c.h.b16 %v877
      %v883 = vunpack.c.l.b16 %v878
      %v884 = vpack.c.b16 %v881, %v881
      %v885 = vpack.c.b16 %v882, %v882
      %v886 = vpack.c.b16 %v883, %v883
      %890 = vst [vmem:[%s224] sm:$0xf] %v884
      %891 = vst [vmem:[%s224 + $0x4] sm:$0xf] %v885
      %892 = vst [vmem:[%s224 + $0x8] sm:$0x3] %v886
      %p893 = scmp.lt.s32.totalorder %s16, 1
      %s894 = scalar_select %p893, %s16, 1
      %s895 = smul.addr %s894, 3
      %s896 = smul.addr %s895, 4
      %s897 = scalar_lea.vmem %s5, %s896
      // Predicated region
      $region41: #{encoder_forward.4} parent=39 // pred_check
        %p898 = pneg %p144
      $region42: #{encoder_forward.4} parent=39 // pred_check_branch
        %900 = sbr.rel (%p898) target = $region44
      $region43: #{encoder_forward.4} parent=39 // pred_region
        _
      $region44: #{encoder_forward.4} parent=39 // pred_fallthru
        _
    $region40: #{encoder_forward.4} parent=5 // pred_fallthru
      _
    %p901 = scmp.le.s32.totalorder 2, %s11
    // Predicated region
    $region45: #{encoder_forward.4} parent=5 // pred_check
      %p902 = pneg %p901
    $region46: #{encoder_forward.4} parent=5 // pred_check_branch
      %904 = sbr.rel (%p902) target = $region48
    $region47: #{encoder_forward.4} parent=5 // pred_region
      %s905 = ssub.s32 %s11, 2
      // Predicated region
      $region49: #{encoder_forward.4} parent=47 // pred_check
        %p906 = pneg %p150
      $region50: #{encoder_forward.4} parent=47 // pred_check_branch
        %908 = sbr.rel (%p906) target = $region52
      $region51: #{encoder_forward.4} parent=47 // pred_region
        %p909 = scmp.lt.s32.totalorder %s17, 1
        %s910 = scalar_select %p909, %s17, 1
        %s911 = smul.addr %s910, 3
        %s912 = smul.addr %s911, 4
        %s913 = scalar_lea.vmem %s5, %s912
      $region52: #{encoder_forward.4} parent=47 // pred_fallthru
        _
    $region48: #{encoder_forward.4} parent=5 // pred_fallthru
      _
  $region6: #{encoder_forward.4} parent=0 // loop_footer
    %s15 = sadd.s32 1, %s11
  $region7: #{encoder_forward.4} parent=0 // loop_footer_branch
    %10 = sbr.rel target = $region3
  $region8: #{encoder_forward.4} parent=0 // loop_exit
    _

// kernel: encoder_forward.5
$region0: #{encoder_forward.5}
  #allocation0 [shape = 'u32[]', space=smem, size = 0x4, offset = 0x4, fixed_abs, tag = 'smem constant byte address 0x4 - core index']
  #allocation1 [shape = 'u32[144,128]{1,0:T(1,128)}', space=vmem, size = 0x12000, scoped, tag = 'internal scratch']
  #allocation2 [shape = 'f32[2,128]{1,0:T(2,128)}', space=vmem, size = 0x400, scoped, tag = 'scratch operand']
  %s0 = inlined_call_operand.vmem [shape: bf16[2,256], index: 0, kind: input, shape index: {}]
  %s1 = inlined_call_operand.vmem [shape: bf16[256,128], index: 1, kind: input, shape index: {}]
  %s2 = inlined_call_operand.vmem [shape: f32[1,128], index: 2, kind: input, shape index: {}]
  %s3 = inlined_call_operand.vmem [shape: f32[2,128], index: 3, kind: output, shape index: {}]
  %s4 = sld [smem:[#allocation0]]
  $region30: #{encoder_forward.5} parent=0
    _
  %s6 = ssub.s32 1, %s4
  %s7 = scalar_select 0, %s6, %s4
  // Predicated region
  $region2: #{encoder_forward.5} parent=0 // pred_check
    _
  $region3: #{encoder_forward.5} parent=0 // pred_check_branch
    %9 = sbr.rel (0) target = $region5
  $region4: #{encoder_forward.5} parent=0 // pred_region
    _
  $region5: #{encoder_forward.5} parent=0 // pred_fallthru
    _
  // Predicated region
  $region6: #{encoder_forward.5} parent=0 // pred_check
    _
  $region7: #{encoder_forward.5} parent=0 // pred_check_branch
    %11 = sbr.rel (0) target = $region9
  $region8: #{encoder_forward.5} parent=0 // pred_region
    _
  $region9: #{encoder_forward.5} parent=0 // pred_fallthru
    _
  // Predicated region
  $region10: #{encoder_forward.5} parent=0 // pred_check
    _
  $region11: #{encoder_forward.5} parent=0 // pred_check_branch
    %13 = sbr.rel (0) target = $region13
  $region12: #{encoder_forward.5} parent=0 // pred_region
    _
  $region13: #{encoder_forward.5} parent=0 // pred_fallthru
    _
  %p15 = scmp.eq.s32.totalorder 0, 0
  // Predicated region
  $region14: #{encoder_forward.5} parent=0 // pred_check
    %p16 = pneg %p15
  $region15: #{encoder_forward.5} parent=0 // pred_check_branch
    %18 = sbr.rel (%p16) target = $region17
  $region16: #{encoder_forward.5} parent=0 // pred_region
    %19 = vst [vmem:[#allocation2] sm:$0x3] 0.0
  $region17: #{encoder_forward.5} parent=0 // pred_fallthru
    _
  %v20 = vld [vmem:[#allocation2] sm:$0x3]
  %v21 = vld [vmem:[%s0] sm:$0x3]
  %v22 = vld [vmem:[%s1] sm:$0xf]
  %v23 = vld [vmem:[%s1 + $0x4] sm:$0xf]
  %v24 = vld [vmem:[%s1 + $0x8] sm:$0xf]
  %v25 = vld [vmem:[%s1 + $0xc] sm:$0xf]
  %v26 = vld [vmem:[%s1 + $0x10] sm:$0xf]
  %v27 = vld [vmem:[%s1 + $0x14] sm:$0xf]
  %v28 = vld [vmem:[%s1 + $0x18] sm:$0xf]
  %v29 = vld [vmem:[%s1 + $0x1c] sm:$0xf]
  %v30 = vld [vmem:[%s1 + $0x20] sm:$0xf]
  %v31 = vld [vmem:[%s1 + $0x24] sm:$0xf]
  %v32 = vld [vmem:[%s1 + $0x28] sm:$0xf]
  %v33 = vld [vmem:[%s1 + $0x2c] sm:$0xf]
  %v34 = vld [vmem:[%s1 + $0x30] sm:$0xf]
  %v35 = vld [vmem:[%s1 + $0x34] sm:$0xf]
  %v36 = vld [vmem:[%s1 + $0x38] sm:$0xf]
  %v37 = vld [vmem:[%s1 + $0x3c] sm:$0xf]
  %v38 = vld [vmem:[%s1 + $0x40] sm:$0xf]
  %v39 = vld [vmem:[%s1 + $0x44] sm:$0xf]
  %v40 = vld [vmem:[%s1 + $0x48] sm:$0xf]
  %v41 = vld [vmem:[%s1 + $0x4c] sm:$0xf]
  %v42 = vld [vmem:[%s1 + $0x50] sm:$0xf]
  %v43 = vld [vmem:[%s1 + $0x54] sm:$0xf]
  %v44 = vld [vmem:[%s1 + $0x58] sm:$0xf]
  %v45 = vld [vmem:[%s1 + $0x5c] sm:$0xf]
  %v46 = vld [vmem:[%s1 + $0x60] sm:$0xf]
  %v47 = vld [vmem:[%s1 + $0x64] sm:$0xf]
  %v48 = vld [vmem:[%s1 + $0x68] sm:$0xf]
  %v49 = vld [vmem:[%s1 + $0x6c] sm:$0xf]
  %v50 = vld [vmem:[%s1 + $0x70] sm:$0xf]
  %v51 = vld [vmem:[%s1 + $0x74] sm:$0xf]
  %v52 = vld [vmem:[%s1 + $0x78] sm:$0xf]
  %v53 = vld [vmem:[%s1 + $0x7c] sm:$0xf]
  %v56 = vunpack.c.l.s4 1966171168
  %v57 = vunpack.c.0.s8 %v56
  %v58 = vlaneseq
  %v59 = vshrl.u32 %v58, 7
  %v60 = vsub.s32 %v57, %v59
  %v61 = vrot.slane %v21, %v60
  %v62 = vcombine.high %v61, %v61
  %v64 = vunpack.c.l.s4 1966171168
  %v65 = vunpack.c.0.s8 %v64
  %v66 = vlaneseq
  %v67 = vshrl.u32 %v66, 7
  %v68 = vsub.s32 %v65, %v67
  %v69 = vrot.slane %v61, %v68
  %v71 = vunpack.c.l.s4 1966171168
  %v72 = vunpack.c.0.s8 %v71
  %v73 = vlaneseq
  %v74 = vshrl.u32 %v73, 7
  %v75 = vsub.s32 %v72, %v74
  %v76 = vrot.slane %v62, %v75
  %v111 = vunpack.c.l.b16 %v22
  %v112 = vunpack.c.l.b16 %v23
  %v113 = vunpack.c.l.b16 %v24
  %v114 = vunpack.c.l.b16 %v25
  %v115 = vunpack.c.l.b16 %v26
  %v116 = vunpack.c.l.b16 %v27
  %v117 = vunpack.c.l.b16 %v28
  %v118 = vunpack.c.l.b16 %v29
  %v119 = vunpack.c.l.b16 %v30
  %v120 = vunpack.c.l.b16 %v31
  %v121 = vunpack.c.l.b16 %v32
  %v122 = vunpack.c.l.b16 %v33
  %v123 = vunpack.c.l.b16 %v34
  %v124 = vunpack.c.l.b16 %v35
  %v125 = vunpack.c.l.b16 %v36
  %v126 = vunpack.c.l.b16 %v37
  %v127 = vunpack.c.l.b16 %v38
  %v128 = vunpack.c.l.b16 %v39
  %v129 = vunpack.c.l.b16 %v40
  %v130 = vunpack.c.l.b16 %v41
  %v131 = vunpack.c.l.b16 %v42
  %v132 = vunpack.c.l.b16 %v43
  %v133 = vunpack.c.l.b16 %v44
  %v134 = vunpack.c.l.b16 %v45
  %v135 = vunpack.c.l.b16 %v46
  %v136 = vunpack.c.l.b16 %v47
  %v137 = vunpack.c.l.b16 %v48
  %v138 = vunpack.c.l.b16 %v49
  %v139 = vunpack.c.l.b16 %v50
  %v140 = vunpack.c.l.b16 %v51
  %v141 = vunpack.c.l.b16 %v52
  %v142 = vunpack.c.l.b16 %v53
  %v143 = vpack.c.b16 %v112, %v111
  %v144 = vpack.c.b16 %v114, %v113
  %v145 = vpack.c.b16 %v116, %v115
  %v146 = vpack.c.b16 %v118, %v117
  %v147 = vpack.c.b16 %v120, %v119
  %v148 = vpack.c.b16 %v122, %v121
  %v149 = vpack.c.b16 %v124, %v123
  %v150 = vpack.c.b16 %v126, %v125
  %v151 = vpack.c.b16 %v128, %v127
  %v152 = vpack.c.b16 %v130, %v129
  %v153 = vpack.c.b16 %v132, %v131
  %v154 = vpack.c.b16 %v134, %v133
  %v155 = vpack.c.b16 %v136, %v135
  %v156 = vpack.c.b16 %v138, %v137
  %v157 = vpack.c.b16 %v140, %v139
  %v158 = vpack.c.b16 %v142, %v141
  %175 = vmatprep.subr.bf16.mxu0 0
  %176 = vmatpush1.bf16.msra.mxu0 %v150
  %177 = vmatprep.subr.bf16.mxu0 0
  %178 = vmatpush1.bf16.msra.mxu0 %v149
  %179 = vmatprep.subr.bf16.mxu0 0
  %180 = vmatpush1.bf16.msra.mxu0 %v148
  %181 = vmatprep.subr.bf16.mxu0 0
  %182 = vmatpush1.bf16.msra.mxu0 %v147
  %183 = vmatprep.subr.bf16.mxu0 0
  %184 = vmatpush1.bf16.msra.mxu0 %v146
  %185 = vmatprep.subr.bf16.mxu0 0
  %186 = vmatpush1.bf16.msra.mxu0 %v145
  %187 = vmatprep.subr.bf16.mxu0 0
  %188 = vmatpush1.bf16.msra.mxu0 %v144
  %189 = vmatprep.subr.bf16.mxu0 0
  %190 = vmatpush1.bf16.msra.mxu0 %v143
  %191 = vmatprep.subr.bf16.mxu0 0
  %192 = vmatpush2.bf16.msra.mxu0 %v158
  %193 = vmatprep.subr.bf16.mxu0 0
  %194 = vmatpush2.bf16.msra.mxu0 %v157
  %195 = vmatprep.subr.bf16.mxu0 0
  %196 = vmatpush2.bf16.msra.mxu0 %v156
  %197 = vmatprep.subr.bf16.mxu0 0
  %198 = vmatpush2.bf16.msra.mxu0 %v155
  %199 = vmatprep.subr.bf16.mxu0 0
  %200 = vmatpush2.bf16.msra.mxu0 %v154
  %201 = vmatprep.subr.bf16.mxu0 0
  %202 = vmatpush2.bf16.msra.mxu0 %v153
  %203 = vmatprep.subr.bf16.mxu0 0
  %204 = vmatpush2.bf16.msra.mxu0 %v152
  %205 = vmatprep.subr.bf16.mxu0 0
  %206 = vmatpush2.bf16.msra.mxu0 %v151
  %207 = vmatprep.mubr.bf16.mxu0 %v76
  %208 = vmatmul.mubr.bf16.gmra.mxu0 %v69
  %v209 = vpop.f32.mrf.mxu0
  %v210 = vadd.f32 0.0, %v209
  %v211 = vpop.f32.mrf.mxu0
  %v212 = vpop.f32.mrf.mxu0
  %v213 = vpop.f32.mrf.mxu0
  %214 = vdwg.mxu0
  %v215 = vadd.f32 %v20, %v210
  %216 = vst [vmem:[#allocation2] sm:$0x3] %v215
  // Predicated region
  $region18: #{encoder_forward.5} parent=0 // pred_check
    %p217 = pneg %p15
  $region19: #{encoder_forward.5} parent=0 // pred_check_branch
    %219 = sbr.rel (%p217) target = $region21
  $region20: #{encoder_forward.5} parent=0 // pred_region
    %v220 = vld [vmem:[#allocation2] sm:$0x3]
    %v221 = vld [vmem:[%s2] sm:$0x1]
    %v223 = vlaneseq
    %v224 = vshrl.u32 %v223, 7
    %v225 = vsub.s32 0, %v224
    %v226 = vrot.slane %v221, %v225
    %v228 = vadd.f32 %v220, %v226
    %229 = vst [vmem:[%s3] sm:$0x3] %v228
  $region21: #{encoder_forward.5} parent=0 // pred_fallthru
    _
  // Predicated region
  $region22: #{encoder_forward.5} parent=0 // pred_check
    _
  $region23: #{encoder_forward.5} parent=0 // pred_check_branch
    %231 = sbr.rel (0) target = $region25
  $region24: #{encoder_forward.5} parent=0 // pred_region
    _
  $region25: #{encoder_forward.5} parent=0 // pred_fallthru
    _
  // Predicated region
  $region26: #{encoder_forward.5} parent=0 // pred_check
    _
  $region27: #{encoder_forward.5} parent=0 // pred_check_branch
    %233 = sbr.rel (0) target = $region29
  $region28: #{encoder_forward.5} parent=0 // pred_region
    _
  $region29: #{encoder_forward.5} parent=0 // pred_fallthru
    _

</llo_original>
